<compile_context>
chip_gen: v6e
topology: v6e:2x2x1
jax: 0.10.0
libtpu: 0.0.40
codegen_flags: <defaults>
</compile_context>

<pallas_src>
import math
from functools import partial

import jax
import jax.numpy as jnp
from jax.experimental import pallas as pl
from jax.experimental.pallas import tpu as pltpu

# ----------------------------- model config ---------------------------------
INPUT_DIM = 2
D_MODEL = 64
NHEAD = 4
HEAD_DIM = D_MODEL // NHEAD
NUM_LAYERS = 2
DIM_FF = 2048          # nn.TransformerEncoderLayer default
NUM_CLASSES_1 = 25
NUM_CLASSES_2 = 24
CONV_K = 5
LN_EPS = 1e-5

VMEM_LIMIT = 48 * 1024 * 1024   # <= v7x physical 64 MiB, raised above v5e/v6e defaults


def _bcast_spec(shape):
    """Whole array as one block, same block index for every grid step (no re-DMA)."""
    return pl.BlockSpec(shape, lambda *_: (0,) * len(shape))


# ------------------------------ shared math ----------------------------------
def _layernorm(z, g, b):
    mu = jnp.mean(z, axis=-1, keepdims=True)
    zc = z - mu
    var = jnp.mean(zc * zc, axis=-1, keepdims=True)
    return zc * jax.lax.rsqrt(var + LN_EPS) * g + b


def _attention_core(xb, qkv_w, qkv_b, out_w, out_b, ln_g, ln_b):
    """QKV proj -> 4-head softmax attention -> out proj -> residual + LN (post-norm).

    xb: [S, D] f32.  qkv_w/out_w are bf16; accumulation is f32.
    """
    qkv = jnp.dot(xb.astype(jnp.bfloat16), qkv_w,
                  preferred_element_type=jnp.float32) + qkv_b            # [S, 3D] f32
    scale = 1.0 / math.sqrt(HEAD_DIM)
    heads = []
    for h in range(NHEAD):                                               # heads split in-kernel
        lo = h * HEAD_DIM
        qh = qkv[:, lo:lo + HEAD_DIM]
        kh = qkv[:, D_MODEL + lo:D_MODEL + lo + HEAD_DIM]
        vh = qkv[:, 2 * D_MODEL + lo:2 * D_MODEL + lo + HEAD_DIM]
        s = jax.lax.dot_general(qh, kh, (((1,), (1,)), ((), ())),
                                preferred_element_type=jnp.float32) * scale   # [S, S]
        s = s - jnp.max(s, axis=-1, keepdims=True)
        p = jnp.exp(s)
        p = p * pl.reciprocal(jnp.sum(p, axis=-1, keepdims=True), approx=True)
        heads.append(jnp.dot(p, vh, preferred_element_type=jnp.float32))      # [S, Dh]
    attn = jnp.concatenate(heads, axis=-1)                                    # [S, D]
    y = jnp.dot(attn.astype(jnp.bfloat16), out_w,
                preferred_element_type=jnp.float32) + out_b
    return _layernorm(xb + y, ln_g, ln_b)


# ------------------------------- kernels -------------------------------------
def _embed_attn_kernel(src_ref, pe_ref, ipw_ref, ipb_ref,
                       qkvw_ref, qkvb_ref, ow_ref, ob_ref, g_ref, b_ref, o_ref):
    src = src_ref[0]                                     # [S, 2]
    ipw = ipw_ref[...]                                   # [2, D]
    # depth-2 input projection on the VPU (avoids a depth-2 MXU contraction) + PE add
    xb = (src[:, 0:1] * ipw[0:1, :] + src[:, 1:2] * ipw[1:2, :]
          + ipb_ref[...] + pe_ref[...])                  # [S, D] f32
    o_ref[0] = _attention_core(xb, qkvw_ref[...], qkvb_ref[...],
                               ow_ref[...], ob_ref[...], g_ref[...], b_ref[...])


def _attn_block_kernel(x_ref, qkvw_ref, qkvb_ref, ow_ref, ob_ref, g_ref, b_ref, o_ref):
    o_ref[0] = _attention_core(x_ref[0], qkvw_ref[...], qkvb_ref[...],
                               ow_ref[...], ob_ref[...], g_ref[...], b_ref[...])


def _ffn_kernel(x_ref, w1_ref, b1_ref, w2_ref, b2_ref, g_ref, b_ref, o_ref):
    x = x_ref[...]                                                          # [TM, D] f32
    h = jnp.dot(x.astype(jnp.bfloat16), w1_ref[...],
                preferred_element_type=jnp.float32) + b1_ref[...]           # [TM, 2048], VMEM only
    h = jnp.maximum(h, 0.0)                                                 # relu
    y = jnp.dot(h.astype(jnp.bfloat16), w2_ref[...],
                preferred_element_type=jnp.float32) + b2_ref[...]           # [TM, D]
    o_ref[...] = _layernorm(x + y, g_ref[...], b_ref[...])


def _conv_relu_pool_kernel(x_ref, w_ref, b_ref, sel_ref, o_ref, *, ksize, l_out):
    x = x_ref[0]                                                            # [Cin, L]
    # im2col in VMEM: stack K shifted views -> one [Cout, K*Cin] x [K*Cin, l_out] matmul
    xcat = jnp.concatenate([x[:, k:k + l_out] for k in range(ksize)], axis=0)
    acc = jnp.dot(w_ref[...], xcat, preferred_element_type=jnp.float32)     # [Cout, l_out]
    # MaxPool1d(2): pairwise neighbour max, then select even columns via a precomputed
    # one-hot (hoisted out of the kernel).  Per-channel bias + ReLU commute with the max.
    m = jnp.maximum(acc[:, :l_out - 1], acc[:, 1:])                         # [Cout, l_out-1]
    pooled = jnp.dot(m, sel_ref[...], preferred_element_type=jnp.float32)   # [Cout, l_pool]
    o_ref[0] = jnp.maximum(pooled + b_ref[...], 0.0)


def _mean_head_kernel(x_ref, w_ref, b_ref, o_ref):
    feat = jnp.mean(x_ref[...], axis=1)                  # mean over channels -> [B, L]
    o_ref[...] = jnp.dot(feat, w_ref[...], preferred_element_type=jnp.float32) + b_ref[...]


# ------------------------------ wrappers --------------------------------------
def _layer_weight_specs():
    return [_bcast_spec((D_MODEL, 3 * D_MODEL)),
            _bcast_spec((1, 3 * D_MODEL)),
            _bcast_spec((D_MODEL, D_MODEL)),
            _bcast_spec((1, D_MODEL)),
            _bcast_spec((1, D_MODEL)),
            _bcast_spec((1, D_MODEL))]


def _layer_weight_args(lyr):
    return (lyr["qkv_w"], lyr["qkv_b"].reshape(1, -1),
            lyr["out_w"], lyr["out_b"].reshape(1, -1),
            lyr["ln1_g"].reshape(1, -1), lyr["ln1_b"].reshape(1, -1))


def embed_attention_block(src, pe, in_w, in_b, lyr):
    B, S, _ = src.shape
    return pl.pallas_call(
        _embed_attn_kernel,
        grid=(B,),
        in_specs=[pl.BlockSpec((1, S, INPUT_DIM), lambda b: (b, 0, 0)),
                  _bcast_spec((S, D_MODEL)),                 # PE broadcast over batch
                  _bcast_spec((INPUT_DIM, D_MODEL)),
                  _bcast_spec((1, D_MODEL))] + _layer_weight_specs(),
        out_specs=pl.BlockSpec((1, S, D_MODEL), lambda b: (b, 0, 0)),
        out_shape=jax.ShapeDtypeStruct((B, S, D_MODEL), jnp.float32),
        compiler_params=pltpu.CompilerParams(
            dimension_semantics=("parallel",), vmem_limit_bytes=VMEM_LIMIT),
    )(src, pe, in_w, in_b.reshape(1, -1), *_layer_weight_args(lyr))


def attention_block(x, lyr):
    B, S, _ = x.shape
    return pl.pallas_call(
        _attn_block_kernel,
        grid=(B,),
        in_specs=[pl.BlockSpec((1, S, D_MODEL), lambda b: (b, 0, 0))]
                 + _layer_weight_specs(),
        out_specs=pl.BlockSpec((1, S, D_MODEL), lambda b: (b, 0, 0)),
        out_shape=jax.ShapeDtypeStruct((B, S, D_MODEL), jnp.float32),
        compiler_params=pltpu.CompilerParams(
            dimension_semantics=("parallel",), vmem_limit_bytes=VMEM_LIMIT),
    )(x, *_layer_weight_args(lyr))


def _row_tile(m, cap=512):
    for t in (1024, 512, 256, 128, 64, 32, 16, 8):
        if t <= cap and m % t == 0:
            return t
    return m


def ffn_block(x, lyr):
    B, S, D = x.shape
    M = B * S
    tm = _row_tile(M)
    xf = x.reshape(M, D)
    flops = 4 * M * D * DIM_FF
    bytes_accessed = (2 * M * D * 4            # activation in + out (f32)
                      + 2 * D * DIM_FF * 2     # two bf16 weight matrices
                      + (DIM_FF + 3 * D) * 4)  # biases + LN params
    out = pl.pallas_call(
        _ffn_kernel,
        grid=(M // tm,),
        in_specs=[pl.BlockSpec((tm, D), lambda i: (i, 0)),
                  _bcast_spec((D, DIM_FF)),
                  _bcast_spec((1, DIM_FF)),
                  _bcast_spec((DIM_FF, D)),
                  _bcast_spec((1, D)),
                  _bcast_spec((1, D)),
                  _bcast_spec((1, D))],
        out_specs=pl.BlockSpec((tm, D), lambda i: (i, 0)),
        out_shape=jax.ShapeDtypeStruct((M, D), jnp.float32),
        compiler_params=pltpu.CompilerParams(
            dimension_semantics=("parallel",), vmem_limit_bytes=VMEM_LIMIT),
        cost_estimate=pl.CostEstimate(flops=flops, transcendentals=0,
                                      bytes_accessed=bytes_accessed),
    )(xf, lyr["ff1_w"], lyr["ff1_b"].reshape(1, -1),
      lyr["ff2_w"], lyr["ff2_b"].reshape(1, -1),
      lyr["ln2_g"].reshape(1, -1), lyr["ln2_b"].reshape(1, -1))
    return out.reshape(B, S, D)


def conv_relu_pool(x, w, b, sel):
    # x: [B, Cin, L]; w: [Cout, K*Cin] tap-major; b: [Cout]; sel: [l_out-1, l_pool]
    B, Cin, L = x.shape
    Cout = w.shape[0]
    l_out = L - CONV_K + 1
    l_pool = sel.shape[1]
    return pl.pallas_call(
        partial(_conv_relu_pool_kernel, ksize=CONV_K, l_out=l_out),
        grid=(B,),
        in_specs=[pl.BlockSpec((1, Cin, L), lambda i: (i, 0, 0)),
                  _bcast_spec((Cout, CONV_K * Cin)),
                  _bcast_spec((Cout, 1)),
                  _bcast_spec((l_out - 1, l_pool))],
        out_specs=pl.BlockSpec((1, Cout, l_pool), lambda i: (i, 0, 0)),
        out_shape=jax.ShapeDtypeStruct((B, Cout, l_pool), jnp.float32),
        compiler_params=pltpu.CompilerParams(
            dimension_semantics=("parallel",), vmem_limit_bytes=VMEM_LIMIT),
    )(x, w, b.reshape(Cout, 1), sel)


def channel_mean_heads(x, w, b):
    # x: [B, C, L]; w: [L, 25+24+1]; b: [25+24+1]
    B, C, L = x.shape
    N = w.shape[1]
    return pl.pallas_call(
        _mean_head_kernel,
        grid=(1,),
        in_specs=[_bcast_spec((B, C, L)), _bcast_spec((L, N)), _bcast_spec((1, N))],
        out_specs=_bcast_spec((B, N)),
        out_shape=jax.ShapeDtypeStruct((B, N), jnp.float32),
    )(x, w, b.reshape(1, N))


# ---------------------------- parameter init ----------------------------------
def make_positional_encoding(max_len, d_model):
    position = jnp.arange(max_len, dtype=jnp.float32)[:, None]
    div_term = jnp.exp(jnp.arange(0, d_model, 2, dtype=jnp.float32)
                       * (-math.log(10000.0) / d_model))
    ang = position * div_term
    pe = jnp.zeros((max_len, d_model), jnp.float32)
    pe = pe.at[:, 0::2].set(jnp.sin(ang)).at[:, 1::2].set(jnp.cos(ang))
    return pe


def _even_select(rows, cols):
    r = jnp.arange(rows)[:, None]
    c = jnp.arange(cols)[None, :]
    return (r == 2 * c).astype(jnp.float32)


def init_params(key, seq_len):
    keys = iter(jax.random.split(key, 64))

    def nrm(shape, scale=0.05, dtype=jnp.float32):
        return (scale * jax.random.normal(next(keys), shape, jnp.float32)).astype(dtype)

    l_out1 = seq_len - CONV_K + 1
    l1 = l_out1 // 2
    l_out2 = l1 - CONV_K + 1
    l2 = l_out2 // 2

    layers = []
    for _ in range(NUM_LAYERS):
        layers.append(dict(
            qkv_w=nrm((D_MODEL, 3 * D_MODEL), dtype=jnp.bfloat16),
            qkv_b=nrm((3 * D_MODEL,)),
            out_w=nrm((D_MODEL, D_MODEL), dtype=jnp.bfloat16),
            out_b=nrm((D_MODEL,)),
            ff1_w=nrm((D_MODEL, DIM_FF), dtype=jnp.bfloat16),
            ff1_b=nrm((DIM_FF,)),
            ff2_w=nrm((DIM_FF, D_MODEL), dtype=jnp.bfloat16),
            ff2_b=nrm((D_MODEL,)),
            ln1_g=jnp.ones((D_MODEL,), jnp.float32), ln1_b=jnp.zeros((D_MODEL,), jnp.float32),
            ln2_g=jnp.ones((D_MODEL,), jnp.float32), ln2_b=jnp.zeros((D_MODEL,), jnp.float32),
        ))

    # head in_features follow the conv output length derived from seq_len
    # (497 at the canonical S=2000); the three heads are fused into one matmul.
    head_w = jnp.concatenate(
        [nrm((l2, NUM_CLASSES_1)), nrm((l2, NUM_CLASSES_2)), nrm((l2, 1))], axis=1)
    head_b = jnp.concatenate(
        [nrm((NUM_CLASSES_1,)), nrm((NUM_CLASSES_2,)), nrm((1,))], axis=0)

    return dict(
        in_proj_w=nrm((INPUT_DIM, D_MODEL)), in_proj_b=nrm((D_MODEL,)),
        pe=make_positional_encoding(seq_len, D_MODEL),
        layers=layers,
        conv1_w=nrm((128, CONV_K * 64)), conv1_b=nrm((128,)),     # tap-major [Cout, K*Cin]
        conv2_w=nrm((256, CONV_K * 128)), conv2_b=nrm((256,)),
        sel1=_even_select(l_out1 - 1, l1),                        # even-column one-hots,
        sel2=_even_select(l_out2 - 1, l2),                        # hoisted out of kernels
        head_w=head_w, head_b=head_b,
    )


# -------------------------------- forward -------------------------------------
def multi_task_transformer_forward(params, src):
    layers = params["layers"]

    # layer 0: fused input_proj + positional encoding + attention block
    x = embed_attention_block(src, params["pe"], params["in_proj_w"],
                              params["in_proj_b"], layers[0])
    x = ffn_block(x, layers[0])
    for lyr in layers[1:]:
        x = attention_block(x, lyr)
        x = ffn_block(x, lyr)

    # [B, S, d] -> NCL [B, d, S]; conv/relu/pool twice
    feat = jnp.transpose(x, (0, 2, 1))
    feat = conv_relu_pool(feat, params["conv1_w"], params["conv1_b"], params["sel1"])
    feat = conv_relu_pool(feat, params["conv2_w"], params["conv2_b"], params["sel2"])

    # channel-mean + all three heads in one fused matmul (dropout = identity)
    heads = channel_mean_heads(feat, params["head_w"], params["head_b"])  # [B, 25+24+1]
    direction_output = heads[:, :NUM_CLASSES_1]
    position_output = heads[:, NUM_CLASSES_1:NUM_CLASSES_1 + NUM_CLASSES_2]
    reg_output = heads[:, NUM_CLASSES_1 + NUM_CLASSES_2]                  # squeeze(-1)
    return direction_output, position_output, reg_output


# ---------------------------------- main ---------------------------------------
if __name__ == "__main__":
    B, S = 2, 64
    src = jax.random.normal(jax.random.PRNGKey(0), (B, S, INPUT_DIM), jnp.float32)
    params = init_params(jax.random.PRNGKey(1), seq_len=S)

    outs = multi_task_transformer_forward(params, src)
    outs = jax.block_until_ready(outs)

    d_out, p_out, r_out = outs
    assert d_out.shape == (B, NUM_CLASSES_1)
    assert p_out.shape == (B, NUM_CLASSES_2)
    assert r_out.shape == (B,)
    assert all(bool(jnp.all(jnp.isfinite(o))) for o in outs)
    print("KERNEL_OK")
</pallas_src>

<mosaic_0001>
module attributes {stable_mosaic.version = 11 : i64} {
  func.func @_embed_attn_kernel(%arg0: i32, %arg1: memref<1x64x2xf32, #tpu.memory_space<vmem>>, %arg2: memref<64x64xf32, #tpu.memory_space<vmem>>, %arg3: memref<2x64xf32, #tpu.memory_space<vmem>>, %arg4: memref<1x64xf32, #tpu.memory_space<vmem>>, %arg5: memref<64x192xbf16, #tpu.memory_space<vmem>>, %arg6: memref<1x192xf32, #tpu.memory_space<vmem>>, %arg7: memref<64x64xbf16, #tpu.memory_space<vmem>>, %arg8: memref<1x64xf32, #tpu.memory_space<vmem>>, %arg9: memref<1x64xf32, #tpu.memory_space<vmem>>, %arg10: memref<1x64xf32, #tpu.memory_space<vmem>>, %arg11: memref<1x64x64xf32, #tpu.memory_space<vmem>>) attributes {dimension_semantics = [#tpu.dimension_semantics<parallel>], iteration_bounds = array<i64: 2>, scalar_prefetch = 0 : i64, scratch_operands = 0 : i64, tpu.core_type = #tpu.core_type<tc>, window_params = [{transform_indices = @transform_0, window_bounds = array<i64: 1, 64, 2>}, {pipeline_mode = #tpu.pipeline_mode<synchronous>, transform_indices = @transform_1, window_bounds = array<i64: 64, 64>}, {pipeline_mode = #tpu.pipeline_mode<synchronous>, transform_indices = @transform_2, window_bounds = array<i64: 2, 64>}, {pipeline_mode = #tpu.pipeline_mode<synchronous>, transform_indices = @transform_3, window_bounds = array<i64: 1, 64>}, {pipeline_mode = #tpu.pipeline_mode<synchronous>, transform_indices = @transform_4, window_bounds = array<i64: 64, 192>}, {pipeline_mode = #tpu.pipeline_mode<synchronous>, transform_indices = @transform_5, window_bounds = array<i64: 1, 192>}, {pipeline_mode = #tpu.pipeline_mode<synchronous>, transform_indices = @transform_6, window_bounds = array<i64: 64, 64>}, {pipeline_mode = #tpu.pipeline_mode<synchronous>, transform_indices = @transform_7, window_bounds = array<i64: 1, 64>}, {pipeline_mode = #tpu.pipeline_mode<synchronous>, transform_indices = @transform_8, window_bounds = array<i64: 1, 64>}, {pipeline_mode = #tpu.pipeline_mode<synchronous>, transform_indices = @transform_9, window_bounds = array<i64: 1, 64>}, {transform_indices = @transform_10, window_bounds = array<i64: 1, 64, 64>}]} {
    %c0 = arith.constant 0 : index
    %c0_0 = arith.constant 0 : index
    %c0_1 = arith.constant 0 : index
    %0 = vector.load %arg1[%c0, %c0_0, %c0_1] : memref<1x64x2xf32, #tpu.memory_space<vmem>>, vector<1x64x2xf32>
    %1 = vector.shape_cast %0 : vector<1x64x2xf32> to vector<64x2xf32>
    %c0_2 = arith.constant 0 : index
    %c0_3 = arith.constant 0 : index
    %2 = vector.load %arg3[%c0_2, %c0_3] : memref<2x64xf32, #tpu.memory_space<vmem>>, vector<2x64xf32>
    %3 = vector.extract_strided_slice %1 {offsets = [0, 0], sizes = [64, 1], strides = [1, 1]} : vector<64x2xf32> to vector<64x1xf32>
    %4 = vector.extract_strided_slice %2 {offsets = [0, 0], sizes = [1, 64], strides = [1, 1]} : vector<2x64xf32> to vector<1x64xf32>
    %5 = vector.broadcast %3 : vector<64x1xf32> to vector<64x64xf32>
    %6 = vector.broadcast %4 : vector<1x64xf32> to vector<64x64xf32>
    %7 = arith.mulf %5, %6 : vector<64x64xf32>
    %8 = vector.extract_strided_slice %1 {offsets = [0, 1], sizes = [64, 1], strides = [1, 1]} : vector<64x2xf32> to vector<64x1xf32>
    %9 = vector.extract_strided_slice %2 {offsets = [1, 0], sizes = [1, 64], strides = [1, 1]} : vector<2x64xf32> to vector<1x64xf32>
    %10 = vector.broadcast %8 : vector<64x1xf32> to vector<64x64xf32>
    %11 = vector.broadcast %9 : vector<1x64xf32> to vector<64x64xf32>
    %12 = arith.mulf %10, %11 : vector<64x64xf32>
    %13 = arith.addf %7, %12 : vector<64x64xf32>
    %c0_4 = arith.constant 0 : index
    %c0_5 = arith.constant 0 : index
    %14 = vector.load %arg4[%c0_4, %c0_5] : memref<1x64xf32, #tpu.memory_space<vmem>>, vector<1x64xf32>
    %15 = vector.broadcast %14 : vector<1x64xf32> to vector<64x64xf32>
    %16 = arith.addf %13, %15 : vector<64x64xf32>
    %c0_6 = arith.constant 0 : index
    %c0_7 = arith.constant 0 : index
    %17 = vector.load %arg2[%c0_6, %c0_7] : memref<64x64xf32, #tpu.memory_space<vmem>>, vector<64x64xf32>
    %18 = arith.addf %16, %17 : vector<64x64xf32>
    %c0_8 = arith.constant 0 : index
    %c0_9 = arith.constant 0 : index
    %19 = vector.load %arg5[%c0_8, %c0_9] : memref<64x192xbf16, #tpu.memory_space<vmem>>, vector<64x192xbf16>
    %c0_10 = arith.constant 0 : index
    %c0_11 = arith.constant 0 : index
    %20 = vector.load %arg6[%c0_10, %c0_11] : memref<1x192xf32, #tpu.memory_space<vmem>>, vector<1x192xf32>
    %c0_12 = arith.constant 0 : index
    %c0_13 = arith.constant 0 : index
    %21 = vector.load %arg7[%c0_12, %c0_13] : memref<64x64xbf16, #tpu.memory_space<vmem>>, vector<64x64xbf16>
    %c0_14 = arith.constant 0 : index
    %c0_15 = arith.constant 0 : index
    %22 = vector.load %arg8[%c0_14, %c0_15] : memref<1x64xf32, #tpu.memory_space<vmem>>, vector<1x64xf32>
    %c0_16 = arith.constant 0 : index
    %c0_17 = arith.constant 0 : index
    %23 = vector.load %arg9[%c0_16, %c0_17] : memref<1x64xf32, #tpu.memory_space<vmem>>, vector<1x64xf32>
    %c0_18 = arith.constant 0 : index
    %c0_19 = arith.constant 0 : index
    %24 = vector.load %arg10[%c0_18, %c0_19] : memref<1x64xf32, #tpu.memory_space<vmem>>, vector<1x64xf32>
    %25 = arith.truncf %18 : vector<64x64xf32> to vector<64x64xbf16>
    %cst = arith.constant dense<0.000000e+00> : vector<64x192xf32>
    %26 = tpu.matmul %25, %19, %cst {dimension_numbers = #tpu.dot_dimension_numbers<[1], [0], [0], [1], [0, 0, 1, 1], [], []>} : vector<64x64xbf16>, vector<64x192xbf16>, vector<64x192xf32> -> vector<64x192xf32>
    %27 = vector.broadcast %20 : vector<1x192xf32> to vector<64x192xf32>
    %28 = arith.addf %26, %27 : vector<64x192xf32>
    %29 = vector.extract_strided_slice %28 {offsets = [0, 0], sizes = [64, 16], strides = [1, 1]} : vector<64x192xf32> to vector<64x16xf32>
    %30 = vector.extract_strided_slice %28 {offsets = [0, 64], sizes = [64, 16], strides = [1, 1]} : vector<64x192xf32> to vector<64x16xf32>
    %31 = vector.extract_strided_slice %28 {offsets = [0, 128], sizes = [64, 16], strides = [1, 1]} : vector<64x192xf32> to vector<64x16xf32>
    %cst_20 = arith.constant dense<0.000000e+00> : vector<64x64xf32>
    %32 = tpu.matmul %29, %30, %cst_20 {dimension_numbers = #tpu.dot_dimension_numbers<[1], [1], [0], [0], [0, 0, 1, 0], [], []>} : vector<64x16xf32>, vector<64x16xf32>, vector<64x64xf32> -> vector<64x64xf32>
    %cst_21 = arith.constant 2.500000e-01 : f32
    %33 = vector.broadcast %cst_21 : f32 to vector<64x64xf32>
    %34 = arith.mulf %32, %33 : vector<64x64xf32>
    %cst_22 = arith.constant dense<0xFF800000> : vector<64xf32>
    %35 = vector.multi_reduction <maximumf>, %34, %cst_22 [1] : vector<64x64xf32> to vector<64xf32>
    %36 = vector.shape_cast %35 : vector<64xf32> to vector<64x1xf32>
    %37 = vector.broadcast %36 : vector<64x1xf32> to vector<64x64xf32>
    %38 = arith.subf %34, %37 : vector<64x64xf32>
    %39 = math.exp %38 : vector<64x64xf32>
    %cst_23 = arith.constant dense<0.000000e+00> : vector<64xf32>
    %40 = vector.multi_reduction <add>, %39, %cst_23 [1] : vector<64x64xf32> to vector<64xf32>
    %41 = vector.shape_cast %40 : vector<64xf32> to vector<64x1xf32>
    %42 = tpu.reciprocal %41 {approx = true} : vector<64x1xf32> -> vector<64x1xf32>
    %43 = vector.broadcast %42 : vector<64x1xf32> to vector<64x64xf32>
    %44 = arith.mulf %39, %43 : vector<64x64xf32>
    %cst_24 = arith.constant dense<0.000000e+00> : vector<64x16xf32>
    %45 = tpu.matmul %44, %31, %cst_24 {dimension_numbers = #tpu.dot_dimension_numbers<[1], [0], [0], [1], [0, 0, 1, 1], [], []>} : vector<64x64xf32>, vector<64x16xf32>, vector<64x16xf32> -> vector<64x16xf32>
    %46 = vector.extract_strided_slice %28 {offsets = [0, 16], sizes = [64, 16], strides = [1, 1]} : vector<64x192xf32> to vector<64x16xf32>
    %47 = vector.extract_strided_slice %28 {offsets = [0, 80], sizes = [64, 16], strides = [1, 1]} : vector<64x192xf32> to vector<64x16xf32>
    %48 = vector.extract_strided_slice %28 {offsets = [0, 144], sizes = [64, 16], strides = [1, 1]} : vector<64x192xf32> to vector<64x16xf32>
    %cst_25 = arith.constant dense<0.000000e+00> : vector<64x64xf32>
    %49 = tpu.matmul %46, %47, %cst_25 {dimension_numbers = #tpu.dot_dimension_numbers<[1], [1], [0], [0], [0, 0, 1, 0], [], []>} : vector<64x16xf32>, vector<64x16xf32>, vector<64x64xf32> -> vector<64x64xf32>
    %cst_26 = arith.constant 2.500000e-01 : f32
    %50 = vector.broadcast %cst_26 : f32 to vector<64x64xf32>
    %51 = arith.mulf %49, %50 : vector<64x64xf32>
    %cst_27 = arith.constant dense<0xFF800000> : vector<64xf32>
    %52 = vector.multi_reduction <maximumf>, %51, %cst_27 [1] : vector<64x64xf32> to vector<64xf32>
    %53 = vector.shape_cast %52 : vector<64xf32> to vector<64x1xf32>
    %54 = vector.broadcast %53 : vector<64x1xf32> to vector<64x64xf32>
    %55 = arith.subf %51, %54 : vector<64x64xf32>
    %56 = math.exp %55 : vector<64x64xf32>
    %cst_28 = arith.constant dense<0.000000e+00> : vector<64xf32>
    %57 = vector.multi_reduction <add>, %56, %cst_28 [1] : vector<64x64xf32> to vector<64xf32>
    %58 = vector.shape_cast %57 : vector<64xf32> to vector<64x1xf32>
    %59 = tpu.reciprocal %58 {approx = true} : vector<64x1xf32> -> vector<64x1xf32>
    %60 = vector.broadcast %59 : vector<64x1xf32> to vector<64x64xf32>
    %61 = arith.mulf %56, %60 : vector<64x64xf32>
    %cst_29 = arith.constant dense<0.000000e+00> : vector<64x16xf32>
    %62 = tpu.matmul %61, %48, %cst_29 {dimension_numbers = #tpu.dot_dimension_numbers<[1], [0], [0], [1], [0, 0, 1, 1], [], []>} : vector<64x64xf32>, vector<64x16xf32>, vector<64x16xf32> -> vector<64x16xf32>
    %63 = vector.extract_strided_slice %28 {offsets = [0, 32], sizes = [64, 16], strides = [1, 1]} : vector<64x192xf32> to vector<64x16xf32>
    %64 = vector.extract_strided_slice %28 {offsets = [0, 96], sizes = [64, 16], strides = [1, 1]} : vector<64x192xf32> to vector<64x16xf32>
    %65 = vector.extract_strided_slice %28 {offsets = [0, 160], sizes = [64, 16], strides = [1, 1]} : vector<64x192xf32> to vector<64x16xf32>
    %cst_30 = arith.constant dense<0.000000e+00> : vector<64x64xf32>
    %66 = tpu.matmul %63, %64, %cst_30 {dimension_numbers = #tpu.dot_dimension_numbers<[1], [1], [0], [0], [0, 0, 1, 0], [], []>} : vector<64x16xf32>, vector<64x16xf32>, vector<64x64xf32> -> vector<64x64xf32>
    %cst_31 = arith.constant 2.500000e-01 : f32
    %67 = vector.broadcast %cst_31 : f32 to vector<64x64xf32>
    %68 = arith.mulf %66, %67 : vector<64x64xf32>
    %cst_32 = arith.constant dense<0xFF800000> : vector<64xf32>
    %69 = vector.multi_reduction <maximumf>, %68, %cst_32 [1] : vector<64x64xf32> to vector<64xf32>
    %70 = vector.shape_cast %69 : vector<64xf32> to vector<64x1xf32>
    %71 = vector.broadcast %70 : vector<64x1xf32> to vector<64x64xf32>
    %72 = arith.subf %68, %71 : vector<64x64xf32>
    %73 = math.exp %72 : vector<64x64xf32>
    %cst_33 = arith.constant dense<0.000000e+00> : vector<64xf32>
    %74 = vector.multi_reduction <add>, %73, %cst_33 [1] : vector<64x64xf32> to vector<64xf32>
    %75 = vector.shape_cast %74 : vector<64xf32> to vector<64x1xf32>
    %76 = tpu.reciprocal %75 {approx = true} : vector<64x1xf32> -> vector<64x1xf32>
    %77 = vector.broadcast %76 : vector<64x1xf32> to vector<64x64xf32>
    %78 = arith.mulf %73, %77 : vector<64x64xf32>
    %cst_34 = arith.constant dense<0.000000e+00> : vector<64x16xf32>
    %79 = tpu.matmul %78, %65, %cst_34 {dimension_numbers = #tpu.dot_dimension_numbers<[1], [0], [0], [1], [0, 0, 1, 1], [], []>} : vector<64x64xf32>, vector<64x16xf32>, vector<64x16xf32> -> vector<64x16xf32>
    %80 = vector.extract_strided_slice %28 {offsets = [0, 48], sizes = [64, 16], strides = [1, 1]} : vector<64x192xf32> to vector<64x16xf32>
    %81 = vector.extract_strided_slice %28 {offsets = [0, 112], sizes = [64, 16], strides = [1, 1]} : vector<64x192xf32> to vector<64x16xf32>
    %82 = vector.extract_strided_slice %28 {offsets = [0, 176], sizes = [64, 16], strides = [1, 1]} : vector<64x192xf32> to vector<64x16xf32>
    %cst_35 = arith.constant dense<0.000000e+00> : vector<64x64xf32>
    %83 = tpu.matmul %80, %81, %cst_35 {dimension_numbers = #tpu.dot_dimension_numbers<[1], [1], [0], [0], [0, 0, 1, 0], [], []>} : vector<64x16xf32>, vector<64x16xf32>, vector<64x64xf32> -> vector<64x64xf32>
    %cst_36 = arith.constant 2.500000e-01 : f32
    %84 = vector.broadcast %cst_36 : f32 to vector<64x64xf32>
    %85 = arith.mulf %83, %84 : vector<64x64xf32>
    %cst_37 = arith.constant dense<0xFF800000> : vector<64xf32>
    %86 = vector.multi_reduction <maximumf>, %85, %cst_37 [1] : vector<64x64xf32> to vector<64xf32>
    %87 = vector.shape_cast %86 : vector<64xf32> to vector<64x1xf32>
    %88 = vector.broadcast %87 : vector<64x1xf32> to vector<64x64xf32>
    %89 = arith.subf %85, %88 : vector<64x64xf32>
    %90 = math.exp %89 : vector<64x64xf32>
    %cst_38 = arith.constant dense<0.000000e+00> : vector<64xf32>
    %91 = vector.multi_reduction <add>, %90, %cst_38 [1] : vector<64x64xf32> to vector<64xf32>
    %92 = vector.shape_cast %91 : vector<64xf32> to vector<64x1xf32>
    %93 = tpu.reciprocal %92 {approx = true} : vector<64x1xf32> -> vector<64x1xf32>
    %94 = vector.broadcast %93 : vector<64x1xf32> to vector<64x64xf32>
    %95 = arith.mulf %90, %94 : vector<64x64xf32>
    %cst_39 = arith.constant dense<0.000000e+00> : vector<64x16xf32>
    %96 = tpu.matmul %95, %82, %cst_39 {dimension_numbers = #tpu.dot_dimension_numbers<[1], [0], [0], [1], [0, 0, 1, 1], [], []>} : vector<64x64xf32>, vector<64x16xf32>, vector<64x16xf32> -> vector<64x16xf32>
    %97 = tpu.concatenate %45, %62, %79, %96 in 1 : vector<64x16xf32>, vector<64x16xf32>, vector<64x16xf32>, vector<64x16xf32> -> vector<64x64xf32>
    %98 = arith.truncf %97 : vector<64x64xf32> to vector<64x64xbf16>
    %cst_40 = arith.constant dense<0.000000e+00> : vector<64x64xf32>
    %99 = tpu.matmul %98, %21, %cst_40 {dimension_numbers = #tpu.dot_dimension_numbers<[1], [0], [0], [1], [0, 0, 1, 1], [], []>} : vector<64x64xbf16>, vector<64x64xbf16>, vector<64x64xf32> -> vector<64x64xf32>
    %100 = vector.broadcast %22 : vector<1x64xf32> to vector<64x64xf32>
    %101 = arith.addf %99, %100 : vector<64x64xf32>
    %102 = arith.addf %18, %101 : vector<64x64xf32>
    %cst_41 = arith.constant dense<0.000000e+00> : vector<64xf32>
    %103 = vector.multi_reduction <add>, %102, %cst_41 [1] : vector<64x64xf32> to vector<64xf32>
    %104 = vector.shape_cast %103 : vector<64xf32> to vector<64x1xf32>
    %cst_42 = arith.constant 6.400000e+01 : f32
    %105 = vector.broadcast %cst_42 : f32 to vector<64x1xf32>
    %106 = arith.divf %104, %105 : vector<64x1xf32>
    %107 = vector.broadcast %106 : vector<64x1xf32> to vector<64x64xf32>
    %108 = arith.subf %102, %107 : vector<64x64xf32>
    %109 = arith.mulf %108, %108 : vector<64x64xf32>
    %cst_43 = arith.constant dense<0.000000e+00> : vector<64xf32>
    %110 = vector.multi_reduction <add>, %109, %cst_43 [1] : vector<64x64xf32> to vector<64xf32>
    %111 = vector.shape_cast %110 : vector<64xf32> to vector<64x1xf32>
    %cst_44 = arith.constant 6.400000e+01 : f32
    %112 = vector.broadcast %cst_44 : f32 to vector<64x1xf32>
    %113 = arith.divf %111, %112 : vector<64x1xf32>
    %cst_45 = arith.constant 9.99999974E-6 : f32
    %114 = vector.broadcast %cst_45 : f32 to vector<64x1xf32>
    %115 = arith.addf %113, %114 : vector<64x1xf32>
    %116 = math.rsqrt %115 : vector<64x1xf32>
    %117 = vector.broadcast %116 : vector<64x1xf32> to vector<64x64xf32>
    %118 = arith.mulf %108, %117 : vector<64x64xf32>
    %119 = vector.broadcast %23 : vector<1x64xf32> to vector<64x64xf32>
    %120 = arith.mulf %118, %119 : vector<64x64xf32>
    %121 = vector.broadcast %24 : vector<1x64xf32> to vector<64x64xf32>
    %122 = arith.addf %120, %121 : vector<64x64xf32>
    %c0_46 = arith.constant 0 : index
    %c0_47 = arith.constant 0 : index
    %c0_48 = arith.constant 0 : index
    %123 = vector.load %arg11[%c0_46, %c0_47, %c0_48] : memref<1x64x64xf32, #tpu.memory_space<vmem>>, vector<1x64x64xf32>
    %124 = vector.shape_cast %123 : vector<1x64x64xf32> to vector<64x64xf32>
    %125 = vector.shape_cast %122 : vector<64x64xf32> to vector<1x64x64xf32>
    tpu.vector_store %arg11[%c0_46, %c0_47, %c0_48], %125 {strides = array<i32>} : memref<1x64x64xf32, #tpu.memory_space<vmem>>, vector<1x64x64xf32>,
    return
  }
  func.func @transform_0(%arg0: i32) -> (i32, i32, i32) {
    %c0_i32 = arith.constant 0 : i32
    %c0_i32_0 = arith.constant 0 : i32
    %c0_i32_1 = arith.constant 0 : i32
    return %arg0, %c0_i32, %c0_i32_0 : i32, i32, i32
  }
  func.func @transform_1(%arg0: i32) -> (i32, i32) {
    %c0_i32 = arith.constant 0 : i32
    %c0_i32_0 = arith.constant 0 : i32
    %c0_i32_1 = arith.constant 0 : i32
    return %c0_i32, %c0_i32_0 : i32, i32
  }
  func.func @transform_2(%arg0: i32) -> (i32, i32) {
    %c0_i32 = arith.constant 0 : i32
    %c0_i32_0 = arith.constant 0 : i32
    %c0_i32_1 = arith.constant 0 : i32
    return %c0_i32, %c0_i32_0 : i32, i32
  }
  func.func @transform_3(%arg0: i32) -> (i32, i32) {
    %c0_i32 = arith.constant 0 : i32
    %c0_i32_0 = arith.constant 0 : i32
    %c0_i32_1 = arith.constant 0 : i32
    return %c0_i32, %c0_i32_0 : i32, i32
  }
  func.func @transform_4(%arg0: i32) -> (i32, i32) {
    %c0_i32 = arith.constant 0 : i32
    %c0_i32_0 = arith.constant 0 : i32
    %c0_i32_1 = arith.constant 0 : i32
    return %c0_i32, %c0_i32_0 : i32, i32
  }
  func.func @transform_5(%arg0: i32) -> (i32, i32) {
    %c0_i32 = arith.constant 0 : i32
    %c0_i32_0 = arith.constant 0 : i32
    %c0_i32_1 = arith.constant 0 : i32
    return %c0_i32, %c0_i32_0 : i32, i32
  }
  func.func @transform_6(%arg0: i32) -> (i32, i32) {
    %c0_i32 = arith.constant 0 : i32
    %c0_i32_0 = arith.constant 0 : i32
    %c0_i32_1 = arith.constant 0 : i32
    return %c0_i32, %c0_i32_0 : i32, i32
  }
  func.func @transform_7(%arg0: i32) -> (i32, i32) {
    %c0_i32 = arith.constant 0 : i32
    %c0_i32_0 = arith.constant 0 : i32
    %c0_i32_1 = arith.constant 0 : i32
    return %c0_i32, %c0_i32_0 : i32, i32
  }
  func.func @transform_8(%arg0: i32) -> (i32, i32) {
    %c0_i32 = arith.constant 0 : i32
    %c0_i32_0 = arith.constant 0 : i32
    %c0_i32_1 = arith.constant 0 : i32
    return %c0_i32, %c0_i32_0 : i32, i32
  }
  func.func @transform_9(%arg0: i32) -> (i32, i32) {
    %c0_i32 = arith.constant 0 : i32
    %c0_i32_0 = arith.constant 0 : i32
    %c0_i32_1 = arith.constant 0 : i32
    return %c0_i32, %c0_i32_0 : i32, i32
  }
  func.func @transform_10(%arg0: i32) -> (i32, i32, i32) {
    %c0_i32 = arith.constant 0 : i32
    %c0_i32_0 = arith.constant 0 : i32
    %c0_i32_1 = arith.constant 0 : i32
    return %arg0, %c0_i32, %c0_i32_0 : i32, i32, i32
  }
}

</mosaic_0001>

<llo_original>
// kernel: tpu_custom_call.1
$region0: #{tpu_custom_call.1}
  #allocation0 [shape = 'u32[]', space=smem, size = 0x4, offset = 0x4, fixed_abs, tag = 'smem constant byte address 0x4 - core index']
  #allocation1 [shape = 'u32[144,128]{1,0:T(1,128)}', space=vmem, size = 0x12000, scoped, tag = 'internal scratch']
  %s0 = inlined_call_operand.vmem [shape: f32[2,64,2], index: 0, kind: input, shape index: {}]
  %s1 = inlined_call_operand.vmem [shape: f32[64,64], index: 1, kind: input, shape index: {}]
  %s2 = inlined_call_operand.vmem [shape: f32[2,64], index: 2, kind: input, shape index: {}]
  %s3 = inlined_call_operand.vmem [shape: f32[1,64], index: 3, kind: input, shape index: {}]
  %s4 = inlined_call_operand.vmem [shape: bf16[64,192], index: 4, kind: input, shape index: {}]
  %s5 = inlined_call_operand.vmem [shape: f32[1,192], index: 5, kind: input, shape index: {}]
  %s6 = inlined_call_operand.hbm [shape: bf16[64,64], index: 6, kind: input, shape index: {}]
  %s7 = inlined_call_operand.vmem [shape: f32[1,64], index: 7, kind: input, shape index: {}]
  %s8 = inlined_call_operand.vmem [shape: f32[1,64], index: 8, kind: input, shape index: {}]
  %s9 = inlined_call_operand.vmem [shape: f32[1,64], index: 9, kind: input, shape index: {}]
  %s10 = inlined_call_operand.hbm [shape: f32[2,64,64], index: 10, kind: output, shape index: {}]
  %s11 = sld [smem:[#allocation0]]
  $region77: #{tpu_custom_call.1} parent=0
    _
  %s13 = ssub.s32 1, %s11
  %s14 = scalar_select 0, %s13, %s11
  $region1: #{tpu_custom_call.1} parent=0
    #allocation2 [shape = 'u8[16384]{0}', space=vmem, size = 0x4000, scoped, tag = 'input window, operand 6, single buffered']
    #allocation3 [shape = 's32[2]{0}', space=sflag, size = 0x8, scoped, tag = 'scoped memory for tpu_custom_call.1']
    #allocation4 [shape = 's32[2]{0}', space=sflag, size = 0x8, scoped, tag = 'scoped memory for tpu_custom_call.1']
    #allocation5 [shape = 'u8[65536]{0}', space=vmem, size = 0x10000, scoped, tag = 'output window, operand 0']
    %15 = vsyncpa [#allocation3], 0
    %16 = vsyncpa [#allocation4], 0
    %s17 = scalar_lea.sflag [#allocation4], 1
    %18 = vsyncpa %s17, 0
    loop: start=0, step=1, limit=4
    $region2: #{tpu_custom_call.1} parent=1 // loop_pre_header
      _
    $region3: #{tpu_custom_call.1} parent=1 // loop_header
      %s20 = sphi 0, %s24
      %p21 = scmp.ge.s32.totalorder %s20, 4
      %s30 = sphi 0, %s32
      %s33 = sphi 0, %s30
      %s34 = sphi 0, %s33
      %s50 = sphi 0, %s34
      %s54 = sphi 0, %s54
      %s56 = sphi 0, %s54
      %s57 = sphi 0, %s56
      %s71 = sphi 0, %s57
      %s75 = sphi 0, %s75
      %s77 = sphi 0, %s75
      %s78 = sphi 0, %s77
      %s92 = sphi 0, %s78
      %s96 = sphi 0, %s96
      %s98 = sphi 0, %s96
      %s99 = sphi 0, %s98
      %s113 = sphi 0, %s99
      %s117 = sphi 0, %s117
      %s119 = sphi 0, %s117
      %s120 = sphi 0, %s119
      %s134 = sphi 0, %s120
      %s138 = sphi 0, %s138
      %s140 = sphi 0, %s138
      %s141 = sphi 0, %s140
      %s155 = sphi 0, %s141
      %s159 = sphi 0, %s159
      %s161 = sphi 0, %s159
      %s162 = sphi 0, %s161
      %s176 = sphi 0, %s162
      %s180 = sphi 0, %s180
      %s182 = sphi 0, %s180
      %s183 = sphi 0, %s182
      %s197 = sphi 0, %s183
      %s201 = sphi 0, %s201
      %s203 = sphi 0, %s201
      %s204 = sphi 0, %s203
      %s218 = sphi 0, %s204
      %s222 = sphi 0, %s222
      %s224 = sphi 0, %s222
      %s225 = sphi 0, %s224
      %s239 = sphi 0, %s225
      %s245 = sphi 0, %s247
      %s248 = sphi 0, %s245
      %s249 = sphi 0, %s248
      %s265 = sphi 0, %s249
    $region4: #{tpu_custom_call.1} parent=1 // loop_header_branch
      %23 = sbr.rel (%p21) target = $region8
    $region5: #{tpu_custom_call.1} parent=1 // loop_body
      %s25 = ssub.s32 %s20, 1
      %s26 = ssub.s32 %s20, 2
      %s27 = sadd.s32 %s20, 1
      %s28 = ssub.s32 %s20, %s27
      %p29 = scmp.eq.s32.totalorder %s28, 0
      %s31 = sadd.s32 %s30, 1
      %s32 = scalar_select %p29, %s30, %s31
      %p35 = pneg %p29
      %p36 = scmp.eq.s32.totalorder %s20, 1
      %p37 = por %p35, %p36
      %p38 = scmp.ne.s32.totalorder %s30, %s33
      %p39 = scmp.eq.s32.totalorder %s20, 0
      %p40 = por %p38, %p39
      %p41 = scmp.ne.s32.totalorder %s30, %s33
      %p42 = scmp.eq.s32.totalorder %s25, 1
      %p43 = por %p41, %p42
      %p44 = scmp.ne.s32.totalorder %s33, %s34
      %p45 = scmp.eq.s32.totalorder %s25, 0
      %p46 = por %p44, %p45
      %p47 = scmp.ne.s32.totalorder %s33, %s34
      %p48 = scmp.eq.s32.totalorder %s26, 1
      %p49 = por %p47, %p48
      %p51 = scmp.ne.s32.totalorder %s34, %s50
      %p52 = scmp.eq.s32.totalorder %s26, 0
      %p53 = por %p51, %p52
      %s55 = sadd.s32 %s54, 1
      %p58 = scmp.eq.s32.totalorder %s20, 1
      %p59 = scmp.ne.s32.totalorder %s54, %s56
      %p60 = scmp.eq.s32.totalorder %s20, 0
      %p61 = por %p59, %p60
      %p62 = scmp.ne.s32.totalorder %s54, %s56
      %p63 = scmp.eq.s32.totalorder %s25, 1
      %p64 = por %p62, %p63
      %p65 = scmp.ne.s32.totalorder %s56, %s57
      %p66 = scmp.eq.s32.totalorder %s25, 0
      %p67 = por %p65, %p66
      %p68 = scmp.ne.s32.totalorder %s56, %s57
      %p69 = scmp.eq.s32.totalorder %s26, 1
      %p70 = por %p68, %p69
      %p72 = scmp.ne.s32.totalorder %s57, %s71
      %p73 = scmp.eq.s32.totalorder %s26, 0
      %p74 = por %p72, %p73
      %s76 = sadd.s32 %s75, 1
      %p79 = scmp.eq.s32.totalorder %s20, 1
      %p80 = scmp.ne.s32.totalorder %s75, %s77
      %p81 = scmp.eq.s32.totalorder %s20, 0
      %p82 = por %p80, %p81
      %p83 = scmp.ne.s32.totalorder %s75, %s77
      %p84 = scmp.eq.s32.totalorder %s25, 1
      %p85 = por %p83, %p84
      %p86 = scmp.ne.s32.totalorder %s77, %s78
      %p87 = scmp.eq.s32.totalorder %s25, 0
      %p88 = por %p86, %p87
      %p89 = scmp.ne.s32.totalorder %s77, %s78
      %p90 = scmp.eq.s32.totalorder %s26, 1
      %p91 = por %p89, %p90
      %p93 = scmp.ne.s32.totalorder %s78, %s92
      %p94 = scmp.eq.s32.totalorder %s26, 0
      %p95 = por %p93, %p94
      %s97 = sadd.s32 %s96, 1
      %p100 = scmp.eq.s32.totalorder %s20, 1
      %p101 = scmp.ne.s32.totalorder %s96, %s98
      %p102 = scmp.eq.s32.totalorder %s20, 0
      %p103 = por %p101, %p102
      %p104 = scmp.ne.s32.totalorder %s96, %s98
      %p105 = scmp.eq.s32.totalorder %s25, 1
      %p106 = por %p104, %p105
      %p107 = scmp.ne.s32.totalorder %s98, %s99
      %p108 = scmp.eq.s32.totalorder %s25, 0
      %p109 = por %p107, %p108
      %p110 = scmp.ne.s32.totalorder %s98, %s99
      %p111 = scmp.eq.s32.totalorder %s26, 1
      %p112 = por %p110, %p111
      %p114 = scmp.ne.s32.totalorder %s99, %s113
      %p115 = scmp.eq.s32.totalorder %s26, 0
      %p116 = por %p114, %p115
      %s118 = sadd.s32 %s117, 1
      %p121 = scmp.eq.s32.totalorder %s20, 1
      %p122 = scmp.ne.s32.totalorder %s117, %s119
      %p123 = scmp.eq.s32.totalorder %s20, 0
      %p124 = por %p122, %p123
      %p125 = scmp.ne.s32.totalorder %s117, %s119
      %p126 = scmp.eq.s32.totalorder %s25, 1
      %p127 = por %p125, %p126
      %p128 = scmp.ne.s32.totalorder %s119, %s120
      %p129 = scmp.eq.s32.totalorder %s25, 0
      %p130 = por %p128, %p129
      %p131 = scmp.ne.s32.totalorder %s119, %s120
      %p132 = scmp.eq.s32.totalorder %s26, 1
      %p133 = por %p131, %p132
      %p135 = scmp.ne.s32.totalorder %s120, %s134
      %p136 = scmp.eq.s32.totalorder %s26, 0
      %p137 = por %p135, %p136
      %s139 = sadd.s32 %s138, 1
      %p142 = scmp.eq.s32.totalorder %s20, 1
      %p143 = scmp.ne.s32.totalorder %s138, %s140
      %p144 = scmp.eq.s32.totalorder %s20, 0
      %p145 = por %p143, %p144
      %p146 = scmp.ne.s32.totalorder %s138, %s140
      %p147 = scmp.eq.s32.totalorder %s25, 1
      %p148 = por %p146, %p147
      %p149 = scmp.ne.s32.totalorder %s140, %s141
      %p150 = scmp.eq.s32.totalorder %s25, 0
      %p151 = por %p149, %p150
      %p152 = scmp.ne.s32.totalorder %s140, %s141
      %p153 = scmp.eq.s32.totalorder %s26, 1
      %p154 = por %p152, %p153
      %p156 = scmp.ne.s32.totalorder %s141, %s155
      %p157 = scmp.eq.s32.totalorder %s26, 0
      %p158 = por %p156, %p157
      %s160 = sadd.s32 %s159, 1
      %p163 = scmp.eq.s32.totalorder %s20, 1
      %p164 = scmp.ne.s32.totalorder %s159, %s161
      %p165 = scmp.eq.s32.totalorder %s20, 0
      %p166 = por %p164, %p165
      %p167 = scmp.ne.s32.totalorder %s159, %s161
      %p168 = scmp.eq.s32.totalorder %s25, 1
      %p169 = por %p167, %p168
      %p170 = scmp.ne.s32.totalorder %s161, %s162
      %p171 = scmp.eq.s32.totalorder %s25, 0
      %p172 = por %p170, %p171
      %p173 = scmp.ne.s32.totalorder %s161, %s162
      %p174 = scmp.eq.s32.totalorder %s26, 1
      %p175 = por %p173, %p174
      %p177 = scmp.ne.s32.totalorder %s162, %s176
      %p178 = scmp.eq.s32.totalorder %s26, 0
      %p179 = por %p177, %p178
      %s181 = sadd.s32 %s180, 1
      %p184 = scmp.eq.s32.totalorder %s20, 1
      %p185 = scmp.ne.s32.totalorder %s180, %s182
      %p186 = scmp.eq.s32.totalorder %s20, 0
      %p187 = por %p185, %p186
      %p188 = scmp.ne.s32.totalorder %s180, %s182
      %p189 = scmp.eq.s32.totalorder %s25, 1
      %p190 = por %p188, %p189
      %p191 = scmp.ne.s32.totalorder %s182, %s183
      %p192 = scmp.eq.s32.totalorder %s25, 0
      %p193 = por %p191, %p192
      %p194 = scmp.ne.s32.totalorder %s182, %s183
      %p195 = scmp.eq.s32.totalorder %s26, 1
      %p196 = por %p194, %p195
      %p198 = scmp.ne.s32.totalorder %s183, %s197
      %p199 = scmp.eq.s32.totalorder %s26, 0
      %p200 = por %p198, %p199
      %s202 = sadd.s32 %s201, 1
      %p205 = scmp.eq.s32.totalorder %s20, 1
      %p206 = scmp.ne.s32.totalorder %s201, %s203
      %p207 = scmp.eq.s32.totalorder %s20, 0
      %p208 = por %p206, %p207
      %p209 = scmp.ne.s32.totalorder %s201, %s203
      %p210 = scmp.eq.s32.totalorder %s25, 1
      %p211 = por %p209, %p210
      %p212 = scmp.ne.s32.totalorder %s203, %s204
      %p213 = scmp.eq.s32.totalorder %s25, 0
      %p214 = por %p212, %p213
      %p215 = scmp.ne.s32.totalorder %s203, %s204
      %p216 = scmp.eq.s32.totalorder %s26, 1
      %p217 = por %p215, %p216
      %p219 = scmp.ne.s32.totalorder %s204, %s218
      %p220 = scmp.eq.s32.totalorder %s26, 0
      %p221 = por %p219, %p220
      %s223 = sadd.s32 %s222, 1
      %p226 = scmp.eq.s32.totalorder %s20, 1
      %p227 = scmp.ne.s32.totalorder %s222, %s224
      %p228 = scmp.eq.s32.totalorder %s20, 0
      %p229 = por %p227, %p228
      %p230 = scmp.ne.s32.totalorder %s222, %s224
      %p231 = scmp.eq.s32.totalorder %s25, 1
      %p232 = por %p230, %p231
      %p233 = scmp.ne.s32.totalorder %s224, %s225
      %p234 = scmp.eq.s32.totalorder %s25, 0
      %p235 = por %p233, %p234
      %p236 = scmp.ne.s32.totalorder %s224, %s225
      %p237 = scmp.eq.s32.totalorder %s26, 1
      %p238 = por %p236, %p237
      %p240 = scmp.ne.s32.totalorder %s225, %s239
      %p241 = scmp.eq.s32.totalorder %s26, 0
      %p242 = por %p240, %p241
      %s243 = ssub.s32 %s20, %s27
      %p244 = scmp.eq.s32.totalorder %s243, 0
      %s246 = sadd.s32 %s245, 1
      %s247 = scalar_select %p244, %s245, %s246
      %p250 = pneg %p244
      %p251 = scmp.eq.s32.totalorder %s20, 1
      %p252 = por %p250, %p251
      %p253 = scmp.ne.s32.totalorder %s245, %s248
      %p254 = scmp.eq.s32.totalorder %s20, 0
      %p255 = por %p253, %p254
      %p256 = scmp.ne.s32.totalorder %s245, %s248
      %p257 = scmp.eq.s32.totalorder %s25, 1
      %p258 = por %p256, %p257
      %p259 = scmp.ne.s32.totalorder %s248, %s249
      %p260 = scmp.eq.s32.totalorder %s25, 0
      %p261 = por %p259, %p260
      %p262 = scmp.ne.s32.totalorder %s248, %s249
      %p263 = scmp.eq.s32.totalorder %s26, 1
      %p264 = por %p262, %p263
      %p266 = scmp.ne.s32.totalorder %s249, %s265
      %p267 = scmp.eq.s32.totalorder %s26, 0
      %p268 = por %p266, %p267
      %p269 = scmp.le.s32.totalorder 1, %s20
      %p270 = scmp.lt.s32.totalorder %s20, 3
      %p271 = pnand %p269, %p270
      %p272 = pneg %p271
      // Predicated region
      $region9: #{tpu_custom_call.1} parent=5 // pred_check
        _
      $region10: #{tpu_custom_call.1} parent=5 // pred_check_branch
        %274 = sbr.rel (%p271) target = $region12
      $region11: #{tpu_custom_call.1} parent=5 // pred_region
        %s275 = ssub.s32 %s20, 1
        // Predicated region
        $region13: #{tpu_custom_call.1} parent=11 // pred_check
          %p276 = pneg %p67
        $region14: #{tpu_custom_call.1} parent=11 // pred_check_branch
          %278 = sbr.rel (%p276) target = $region16
        $region15: #{tpu_custom_call.1} parent=11 // pred_region
          _
        $region16: #{tpu_custom_call.1} parent=11 // pred_fallthru
          _
        // Predicated region
        $region17: #{tpu_custom_call.1} parent=11 // pred_check
          %p279 = pneg %p88
        $region18: #{tpu_custom_call.1} parent=11 // pred_check_branch
          %281 = sbr.rel (%p279) target = $region20
        $region19: #{tpu_custom_call.1} parent=11 // pred_region
          _
        $region20: #{tpu_custom_call.1} parent=11 // pred_fallthru
          _
        // Predicated region
        $region21: #{tpu_custom_call.1} parent=11 // pred_check
          %p282 = pneg %p109
        $region22: #{tpu_custom_call.1} parent=11 // pred_check_branch
          %284 = sbr.rel (%p282) target = $region24
        $region23: #{tpu_custom_call.1} parent=11 // pred_region
          _
        $region24: #{tpu_custom_call.1} parent=11 // pred_fallthru
          _
        // Predicated region
        $region25: #{tpu_custom_call.1} parent=11 // pred_check
          %p285 = pneg %p130
        $region26: #{tpu_custom_call.1} parent=11 // pred_check_branch
          %287 = sbr.rel (%p285) target = $region28
        $region27: #{tpu_custom_call.1} parent=11 // pred_region
          _
        $region28: #{tpu_custom_call.1} parent=11 // pred_fallthru
          _
        // Predicated region
        $region29: #{tpu_custom_call.1} parent=11 // pred_check
          %p288 = pneg %p151
        $region30: #{tpu_custom_call.1} parent=11 // pred_check_branch
          %290 = sbr.rel (%p288) target = $region32
        $region31: #{tpu_custom_call.1} parent=11 // pred_region
          _
        $region32: #{tpu_custom_call.1} parent=11 // pred_fallthru
          _
        // Predicated region
        $region33: #{tpu_custom_call.1} parent=11 // pred_check
          %p291 = pneg %p172
        $region34: #{tpu_custom_call.1} parent=11 // pred_check_branch
          %293 = sbr.rel (%p291) target = $region36
        $region35: #{tpu_custom_call.1} parent=11 // pred_region
          %s295 = ssub.s32 512, 512
          %296 = vsyncadd [#allocation3], %s295
          %s297 = sshll.u32 [#allocation2], 4
          %s298 = int_to_ptr.vmem [resolvable:$true] %s297
          %303 = dma.hbm_to_vmem [thread:$0]  %s6, 512, %s298, [#allocation3], 64, 64, 4
        $region36: #{tpu_custom_call.1} parent=11 // pred_fallthru
          _
        // Predicated region
        $region37: #{tpu_custom_call.1} parent=11 // pred_check
          %p304 = pneg %p193
        $region38: #{tpu_custom_call.1} parent=11 // pred_check_branch
          %306 = sbr.rel (%p304) target = $region40
        $region39: #{tpu_custom_call.1} parent=11 // pred_region
          _
        $region40: #{tpu_custom_call.1} parent=11 // pred_fallthru
          _
        // Predicated region
        $region41: #{tpu_custom_call.1} parent=11 // pred_check
          %p307 = pneg %p214
        $region42: #{tpu_custom_call.1} parent=11 // pred_check_branch
          %309 = sbr.rel (%p307) target = $region44
        $region43: #{tpu_custom_call.1} parent=11 // pred_region
          _
        $region44: #{tpu_custom_call.1} parent=11 // pred_fallthru
          _
        // Predicated region
        $region45: #{tpu_custom_call.1} parent=11 // pred_check
          %p310 = pneg %p235
        $region46: #{tpu_custom_call.1} parent=11 // pred_check_branch
          %312 = sbr.rel (%p310) target = $region48
        $region47: #{tpu_custom_call.1} parent=11 // pred_region
          _
        $region48: #{tpu_custom_call.1} parent=11 // pred_fallthru
          _
      $region12: #{tpu_custom_call.1} parent=5 // pred_fallthru
        _
      %p313 = scmp.lt.s32.totalorder %s20, 2
      // Predicated region
      $region49: #{tpu_custom_call.1} parent=5 // pred_check
        %p314 = pneg %p313
      $region50: #{tpu_custom_call.1} parent=5 // pred_check_branch
        %316 = sbr.rel (%p314) target = $region52
      $region51: #{tpu_custom_call.1} parent=5 // pred_region
        // Predicated region
        $region53: #{tpu_custom_call.1} parent=51 // pred_check
          %p317 = pneg %p40
        $region54: #{tpu_custom_call.1} parent=51 // pred_check_branch
          %319 = sbr.rel (%p317) target = $region56
        $region55: #{tpu_custom_call.1} parent=51 // pred_region
          %p320 = scmp.lt.s32.totalorder %s20, 1
          %s321 = scalar_select %p320, %s20, 1
          %s322 = smul.addr %s321, 8
          %s323 = smul.addr %s322, 8
          %s324 = scalar_lea.vmem %s0, %s323
        $region56: #{tpu_custom_call.1} parent=51 // pred_fallthru
          _
      $region52: #{tpu_custom_call.1} parent=5 // pred_fallthru
        _
      %p325 = scmp.le.s32.totalorder 1, %s20
      %p326 = scmp.lt.s32.totalorder %s20, 3
      %p327 = pnand %p325, %p326
      %p328 = pneg %p327
      // Predicated region
      $region57: #{tpu_custom_call.1} parent=5 // pred_check
        _
      $region58: #{tpu_custom_call.1} parent=5 // pred_check_branch
        %330 = sbr.rel (%p327) target = $region60
      $region59: #{tpu_custom_call.1} parent=5 // pred_region
        %s331 = ssub.s32 %s20, 1
        // Predicated region
        $region61: #{tpu_custom_call.1} parent=59 // pred_check
          %p332 = pneg %p172
        $region62: #{tpu_custom_call.1} parent=59 // pred_check_branch
          %334 = sbr.rel (%p332) target = $region64
        $region63: #{tpu_custom_call.1} parent=59 // pred_region
          %335 = dma.done [#allocation3], 512
        $region64: #{tpu_custom_call.1} parent=59 // pred_fallthru
          _
        %p336 = scmp.lt.s32.totalorder %s25, 1
        %s337 = scalar_select %p336, %s25, 1
        %s338 = smul.addr %s337, 8
        %s339 = smul.addr %s338, 8
        %s340 = scalar_lea.vmem %s0, %s339
        %p341 = pneg %p46
        %p342 = pneg %p43
        %p343 = pneg %p67
        %p344 = pneg %p64
        %p345 = pneg %p88
        %p346 = pneg %p85
        %p347 = pneg %p109
        %p348 = pneg %p106
        %p349 = pneg %p130
        %p350 = pneg %p127
        %p351 = pneg %p151
        %p352 = pneg %p148
        %p353 = pneg %p172
        %p354 = pneg %p169
        %p355 = pneg %p193
        %p356 = pneg %p190
        %p357 = pneg %p214
        %p358 = pneg %p211
        %p359 = pneg %p235
        %p360 = pneg %p232
        %p361 = pneg %p261
        %p362 = pneg %p258
        %s363 = sand.u32 %s248, 1
        %s364 = scalar_lea.sflag [#allocation4], %s363
        %s365 = sand.u32 %s248, 1
        %s366 = smul.addr %s365, 64
        %s367 = scalar_lea.vmem [#allocation5], %s366
        %p368 = scmp.lt.s32.totalorder %s25, 1
        %s369 = scalar_select %p368, %s25, 1
        %s370 = smul.addr %s369, 8
        %s371 = smul.addr %s370, 8
        %s372 = scalar_lea.vmem %s0, %s371
        %v374 = vld [vmem:[%s372] sm:$0xff]
        %v375 = vld [vmem:[%s372 + $0x8] sm:$0xff]
        %v376 = vld [vmem:[%s372 + $0x10] sm:$0xff]
        %v377 = vld [vmem:[%s372 + $0x18] sm:$0xff]
        %v378 = vld [vmem:[%s372 + $0x20] sm:$0xff]
        %v379 = vld [vmem:[%s372 + $0x28] sm:$0xff]
        %v380 = vld [vmem:[%s372 + $0x30] sm:$0xff]
        %v381 = vld [vmem:[%s372 + $0x38] sm:$0xff]
        %v382 = vld [vmem:[%s2] sm:$0x3]
        %384 = vset.pattern.permute.xlu0 0
        %385 = vperm.xlu0 %384, %v374
        %v386 = vpop.permute.xlu0 %385
        %389 = vset.pattern.permute.xlu0 0
        %390 = vperm.xlu0 %389, %v375
        %v391 = vpop.permute.xlu0 %390
        %394 = vset.pattern.permute.xlu0 0
        %395 = vperm.xlu0 %394, %v376
        %v396 = vpop.permute.xlu0 %395
        %399 = vset.pattern.permute.xlu0 0
        %400 = vperm.xlu0 %399, %v377
        %v401 = vpop.permute.xlu0 %400
        %404 = vset.pattern.permute.xlu0 0
        %405 = vperm.xlu0 %404, %v378
        %v406 = vpop.permute.xlu0 %405
        %409 = vset.pattern.permute.xlu0 0
        %410 = vperm.xlu0 %409, %v379
        %v411 = vpop.permute.xlu0 %410
        %414 = vset.pattern.permute.xlu0 0
        %415 = vperm.xlu0 %414, %v380
        %v416 = vpop.permute.xlu0 %415
        %419 = vset.pattern.permute.xlu0 0
        %420 = vperm.xlu0 %419, %v381
        %v421 = vpop.permute.xlu0 %420
        %v423 = vlaneseq
        %v424 = vshrl.u32 %v423, 7
        %v425 = vsub.s32 0, %v424
        %v426 = vrot.slane %v382, %v425
        %v427 = vmul.f32 %v386, %v426
        %v428 = vmul.f32 %v391, %v426
        %v429 = vmul.f32 %v396, %v426
        %v430 = vmul.f32 %v401, %v426
        %v431 = vmul.f32 %v406, %v426
        %v432 = vmul.f32 %v411, %v426
        %v433 = vmul.f32 %v416, %v426
        %v434 = vmul.f32 %v421, %v426
        %435 = vset.pattern.permute.xlu0 1
        %436 = vperm.xlu0 %435, %v374
        %v437 = vpop.permute.xlu0 %436
        %439 = vset.pattern.permute.xlu0 1
        %440 = vperm.xlu0 %439, %v375
        %v441 = vpop.permute.xlu0 %440
        %443 = vset.pattern.permute.xlu0 1
        %444 = vperm.xlu0 %443, %v376
        %v445 = vpop.permute.xlu0 %444
        %447 = vset.pattern.permute.xlu0 1
        %448 = vperm.xlu0 %447, %v377
        %v449 = vpop.permute.xlu0 %448
        %451 = vset.pattern.permute.xlu0 1
        %452 = vperm.xlu0 %451, %v378
        %v453 = vpop.permute.xlu0 %452
        %455 = vset.pattern.permute.xlu0 1
        %456 = vperm.xlu0 %455, %v379
        %v457 = vpop.permute.xlu0 %456
        %459 = vset.pattern.permute.xlu0 1
        %460 = vperm.xlu0 %459, %v380
        %v461 = vpop.permute.xlu0 %460
        %463 = vset.pattern.permute.xlu0 1
        %464 = vperm.xlu0 %463, %v381
        %v465 = vpop.permute.xlu0 %464
        %v467 = vlaneseq
        %v468 = vshrl.u32 %v467, 7
        %v469 = vsub.s32 1, %v468
        %v470 = vrot.slane %v382, %v469
        %v471 = vmul.f32 %v437, %v470
        %v472 = vmul.f32 %v441, %v470
        %v473 = vmul.f32 %v445, %v470
        %v474 = vmul.f32 %v449, %v470
        %v475 = vmul.f32 %v453, %v470
        %v476 = vmul.f32 %v457, %v470
        %v477 = vmul.f32 %v461, %v470
        %v478 = vmul.f32 %v465, %v470
        %v479 = vadd.f32 %v427, %v471
        %v480 = vadd.f32 %v428, %v472
        %v481 = vadd.f32 %v429, %v473
        %v482 = vadd.f32 %v430, %v474
        %v483 = vadd.f32 %v431, %v475
        %v484 = vadd.f32 %v432, %v476
        %v485 = vadd.f32 %v433, %v477
        %v486 = vadd.f32 %v434, %v478
        %v487 = vld [vmem:[%s3] sm:$0x1]
        %v489 = vlaneseq
        %v490 = vshrl.u32 %v489, 7
        %v491 = vsub.s32 0, %v490
        %v492 = vrot.slane %v487, %v491
        %v494 = vadd.f32 %v479, %v492
        %v495 = vadd.f32 %v480, %v492
        %v496 = vadd.f32 %v481, %v492
        %v497 = vadd.f32 %v482, %v492
        %v498 = vadd.f32 %v483, %v492
        %v499 = vadd.f32 %v484, %v492
        %v500 = vadd.f32 %v485, %v492
        %v501 = vadd.f32 %v486, %v492
        %v502 = vld [vmem:[%s1] sm:$0xff]
        %v503 = vld [vmem:[%s1 + $0x8] sm:$0xff]
        %v504 = vld [vmem:[%s1 + $0x10] sm:$0xff]
        %v505 = vld [vmem:[%s1 + $0x18] sm:$0xff]
        %v506 = vld [vmem:[%s1 + $0x20] sm:$0xff]
        %v507 = vld [vmem:[%s1 + $0x28] sm:$0xff]
        %v508 = vld [vmem:[%s1 + $0x30] sm:$0xff]
        %v509 = vld [vmem:[%s1 + $0x38] sm:$0xff]
        %v510 = vadd.f32 %v494, %v502
        %v511 = vadd.f32 %v495, %v503
        %v512 = vadd.f32 %v496, %v504
        %v513 = vadd.f32 %v497, %v505
        %v514 = vadd.f32 %v498, %v506
        %v515 = vadd.f32 %v499, %v507
        %v516 = vadd.f32 %v500, %v508
        %v517 = vadd.f32 %v501, %v509
        %v518 = vld [vmem:[%s4] sm:$0xff]
        %v519 = vld [vmem:[%s4 + $0x8] sm:$0xff]
        %v520 = vld [vmem:[%s4 + $0x10] sm:$0xff]
        %v521 = vld [vmem:[%s4 + $0x18] sm:$0xff]
        %v522 = vld [vmem:[%s4 + $0x20] sm:$0xff]
        %v523 = vld [vmem:[%s4 + $0x28] sm:$0xff]
        %v524 = vld [vmem:[%s4 + $0x30] sm:$0xff]
        %v525 = vld [vmem:[%s4 + $0x38] sm:$0xff]
        %v526 = vld [vmem:[%s5] sm:$0x3]
        %v527 = vld [vmem:[#allocation2] sm:$0xf]
        %v528 = vld [vmem:[#allocation2 + $0x4] sm:$0xf]
        %v529 = vld [vmem:[#allocation2 + $0x8] sm:$0xf]
        %v530 = vld [vmem:[#allocation2 + $0xc] sm:$0xf]
        %v531 = vld [vmem:[#allocation2 + $0x10] sm:$0xf]
        %v532 = vld [vmem:[#allocation2 + $0x14] sm:$0xf]
        %v533 = vld [vmem:[#allocation2 + $0x18] sm:$0xf]
        %v534 = vld [vmem:[#allocation2 + $0x1c] sm:$0xf]
        %v535 = vld [vmem:[%s7] sm:$0x1]
        %v536 = vld [vmem:[%s8] sm:$0x1]
        %v537 = vld [vmem:[%s9] sm:$0x1]
        %v538 = vpack.c.bf16 %v511, %v510
        %v539 = vpack.c.bf16 %v513, %v512
        %v540 = vpack.c.bf16 %v515, %v514
        %v541 = vpack.c.bf16 %v517, %v516
        %v543 = vlaneseq
        %v544 = vshrl.u32 %v543, 7
        %v545 = vsub.s32 0, %v544
        %v546 = vrot.slane %v526, %v545
        %v547 = vlaneseq
        %v548 = vshrl.u32 %v547, 7
        %v549 = vsub.s32 1, %v548
        %v550 = vrot.slane %v526, %v549
        %v561 = vunpack.c.l.b16 %v518
        %v562 = vunpack.c.h.b16 %v518
        %v563 = vunpack.c.l.b16 %v519
        %v564 = vunpack.c.h.b16 %v519
        %v565 = vunpack.c.l.b16 %v520
        %v566 = vunpack.c.h.b16 %v520
        %v567 = vunpack.c.l.b16 %v521
        %v568 = vunpack.c.h.b16 %v521
        %v569 = vunpack.c.l.b16 %v522
        %v570 = vunpack.c.h.b16 %v522
        %v571 = vunpack.c.l.b16 %v523
        %v572 = vunpack.c.h.b16 %v523
        %v573 = vunpack.c.l.b16 %v524
        %v574 = vunpack.c.h.b16 %v524
        %v575 = vunpack.c.l.b16 %v525
        %v576 = vunpack.c.h.b16 %v525
        %v577 = vpack.c.b16 %v563, %v561
        %v578 = vpack.c.b16 %v564, %v562
        %v579 = vpack.c.b16 %v567, %v565
        %v580 = vpack.c.b16 %v568, %v566
        %v581 = vpack.c.b16 %v571, %v569
        %v582 = vpack.c.b16 %v572, %v570
        %v583 = vpack.c.b16 %v575, %v573
        %v584 = vpack.c.b16 %v576, %v574
        %vm593 = vcmask 523264
        %v595 = vsel %vm593, %v538, 0
        %v598 = vsel %vm593, %v539, 0
        %v601 = vsel %vm593, %v540, 0
        %v604 = vsel %vm593, %v541, 0
        %606 = vmatprep.subr.bf16.mxu0 0
        %607 = vmatpush1.bf16.msra.mxu0 0
        %608 = vmatprep.subr.bf16.mxu0 0
        %609 = vmatpush1.bf16.msra.mxu0 0
        %610 = vmatprep.subr.bf16.mxu0 0
        %611 = vmatpush1.bf16.msra.mxu0 0
        %612 = vmatprep.subr.bf16.mxu0 0
        %613 = vmatpush1.bf16.msra.mxu0 0
        %614 = vmatprep.subr.bf16.mxu0 %v584
        %615 = vmatpush1.bf16.msra.mxu0 %v583
        %616 = vmatprep.subr.bf16.mxu0 %v582
        %617 = vmatpush1.bf16.msra.mxu0 %v581
        %618 = vmatprep.subr.bf16.mxu0 %v580
        %619 = vmatpush1.bf16.msra.mxu0 %v579
        %620 = vmatprep.subr.bf16.mxu0 %v578
        %621 = vmatpush1.bf16.msra.mxu0 %v577
        %622 = vmatprep.subr.bf16.mxu0 0
        %623 = vmatpush2.bf16.msra.mxu0 0
        %624 = vmatprep.subr.bf16.mxu0 0
        %625 = vmatpush2.bf16.msra.mxu0 0
        %626 = vmatprep.subr.bf16.mxu0 0
        %627 = vmatpush2.bf16.msra.mxu0 0
        %628 = vmatprep.subr.bf16.mxu0 0
        %629 = vmatpush2.bf16.msra.mxu0 0
        %630 = vmatprep.subr.bf16.mxu0 0
        %631 = vmatpush2.bf16.msra.mxu0 0
        %632 = vmatprep.subr.bf16.mxu0 0
        %633 = vmatpush2.bf16.msra.mxu0 0
        %634 = vmatprep.subr.bf16.mxu0 0
        %635 = vmatpush2.bf16.msra.mxu0 0
        %636 = vmatprep.subr.bf16.mxu0 0
        %637 = vmatpush2.bf16.msra.mxu0 0
        %638 = vmatprep.mubr.bf16.mxu0 0
        %639 = vmatmul.mubr.bf16.gmra.mxu0 %v595
        %v640 = vpop.f32.mrf.mxu0
        %v641 = vadd.f32 %v546, %v640
        %v642 = vpop.f32.mrf.mxu0
        %v643 = vadd.f32 %v550, %v642
        %v644 = vpop.f32.mrf.mxu0
        %v645 = vadd.f32 %v546, %v644
        %v646 = vpop.f32.mrf.mxu0
        %v647 = vadd.f32 %v550, %v646
        %648 = vmatprep.mubr.bf16.mxu0 0
        %649 = vmatmul.mubr.bf16.gmra.mxu0 %v598
        %v650 = vpop.f32.mrf.mxu0
        %v651 = vadd.f32 %v546, %v650
        %v652 = vpop.f32.mrf.mxu0
        %v653 = vadd.f32 %v550, %v652
        %v654 = vpop.f32.mrf.mxu0
        %v655 = vadd.f32 %v546, %v654
        %v656 = vpop.f32.mrf.mxu0
        %v657 = vadd.f32 %v550, %v656
        %658 = vmatprep.mubr.bf16.mxu0 0
        %659 = vmatmul.mubr.bf16.gmra.mxu0 %v601
        %v660 = vpop.f32.mrf.mxu0
        %v661 = vadd.f32 %v546, %v660
        %v662 = vpop.f32.mrf.mxu0
        %v663 = vadd.f32 %v550, %v662
        %v664 = vpop.f32.mrf.mxu0
        %v665 = vadd.f32 %v546, %v664
        %v666 = vpop.f32.mrf.mxu0
        %v667 = vadd.f32 %v550, %v666
        %668 = vmatprep.mubr.bf16.mxu0 0
        %669 = vmatmul.mubr.bf16.gmra.mxu0 %v604
        %v670 = vpop.f32.mrf.mxu0
        %v671 = vadd.f32 %v546, %v670
        %v672 = vpop.f32.mrf.mxu0
        %v673 = vadd.f32 %v550, %v672
        %v674 = vpop.f32.mrf.mxu0
        %v675 = vadd.f32 %v546, %v674
        %v676 = vpop.f32.mrf.mxu0
        %v677 = vadd.f32 %v550, %v676
        %678 = vdwg.mxu0
        %687 = vrot.lane.b32.xlu0 %v641, 64
        %v688 = vpop.permute.xlu0 %687
        %689 = vrot.lane.b32.xlu0 %v645, 64
        %v690 = vpop.permute.xlu0 %689
        %691 = vrot.lane.b32.xlu0 %v651, 64
        %v692 = vpop.permute.xlu0 %691
        %693 = vrot.lane.b32.xlu0 %v655, 64
        %v694 = vpop.permute.xlu0 %693
        %695 = vrot.lane.b32.xlu0 %v661, 64
        %v696 = vpop.permute.xlu0 %695
        %697 = vrot.lane.b32.xlu0 %v665, 64
        %v698 = vpop.permute.xlu0 %697
        %699 = vrot.lane.b32.xlu0 %v671, 64
        %v700 = vpop.permute.xlu0 %699
        %701 = vrot.lane.b32.xlu0 %v675, 64
        %v702 = vpop.permute.xlu0 %701
        %vm703 = vcmask 130048
        %v704 = vsel %vm703, %v641, 0
        %v706 = vsel %vm703, %v645, 0
        %v708 = vsel %vm703, %v651, 0
        %v710 = vsel %vm703, %v655, 0
        %v712 = vsel %vm703, %v661, 0
        %v714 = vsel %vm703, %v665, 0
        %v716 = vsel %vm703, %v671, 0
        %v718 = vsel %vm703, %v675, 0
        %v720 = vsel %vm703, %v688, 0
        %v722 = vsel %vm703, %v690, 0
        %v724 = vsel %vm703, %v692, 0
        %v726 = vsel %vm703, %v694, 0
        %v728 = vsel %vm703, %v696, 0
        %v730 = vsel %vm703, %v698, 0
        %v732 = vsel %vm703, %v700, 0
        %v734 = vsel %vm703, %v702, 0
        %736 = vmatprep.subr.mxu0 0.0
        %737 = vmatpush1.xpose.msra.mxu0 0.0
        %738 = vmatprep.subr.mxu0 0.0
        %739 = vmatpush1.xpose.msra.mxu0 0.0
        %740 = vmatprep.subr.mxu0 0.0
        %741 = vmatpush1.xpose.msra.mxu0 0.0
        %742 = vmatprep.subr.mxu0 0.0
        %743 = vmatpush1.xpose.msra.mxu0 0.0
        %744 = vmatprep.subr.mxu0 0.0
        %745 = vmatpush1.xpose.msra.mxu0 0.0
        %746 = vmatprep.subr.mxu0 0.0
        %747 = vmatpush1.xpose.msra.mxu0 0.0
        %748 = vmatprep.subr.mxu0 0.0
        %749 = vmatpush1.xpose.msra.mxu0 0.0
        %750 = vmatprep.subr.mxu0 0.0
        %751 = vmatpush1.xpose.msra.mxu0 0.0
        %752 = vmatprep.subr.mxu0 0.0
        %753 = vmatpush1.xpose.msra.mxu0 %v734
        %754 = vmatprep.subr.mxu0 0.0
        %755 = vmatpush1.xpose.msra.mxu0 %v732
        %756 = vmatprep.subr.mxu0 0.0
        %757 = vmatpush1.xpose.msra.mxu0 %v730
        %758 = vmatprep.subr.mxu0 0.0
        %759 = vmatpush1.xpose.msra.mxu0 %v728
        %760 = vmatprep.subr.mxu0 0.0
        %761 = vmatpush1.xpose.msra.mxu0 %v726
        %762 = vmatprep.subr.mxu0 0.0
        %763 = vmatpush1.xpose.msra.mxu0 %v724
        %764 = vmatprep.subr.mxu0 0.0
        %765 = vmatpush1.xpose.msra.mxu0 %v722
        %766 = vmatprep.subr.mxu0 0.0
        %767 = vmatpush1.xpose.msra.mxu0 %v720
        %768 = vmatprep.subr.mxu0 0.0
        %769 = vmatpush2.xpose.msra.mxu0 0.0
        %770 = vmatprep.subr.mxu0 0.0
        %771 = vmatpush2.xpose.msra.mxu0 0.0
        %772 = vmatprep.subr.mxu0 0.0
        %773 = vmatpush2.xpose.msra.mxu0 0.0
        %774 = vmatprep.subr.mxu0 0.0
        %775 = vmatpush2.xpose.msra.mxu0 0.0
        %776 = vmatprep.subr.mxu0 0.0
        %777 = vmatpush2.xpose.msra.mxu0 0.0
        %778 = vmatprep.subr.mxu0 0.0
        %779 = vmatpush2.xpose.msra.mxu0 0.0
        %780 = vmatprep.subr.mxu0 0.0
        %781 = vmatpush2.xpose.msra.mxu0 0.0
        %782 = vmatprep.subr.mxu0 0.0
        %783 = vmatpush2.xpose.msra.mxu0 0.0
        %784 = vmatprep.subr.mxu0 0.0
        %785 = vmatpush2.xpose.msra.mxu0 0.0
        %786 = vmatprep.subr.mxu0 0.0
        %787 = vmatpush2.xpose.msra.mxu0 0.0
        %788 = vmatprep.subr.mxu0 0.0
        %789 = vmatpush2.xpose.msra.mxu0 0.0
        %790 = vmatprep.subr.mxu0 0.0
        %791 = vmatpush2.xpose.msra.mxu0 0.0
        %792 = vmatprep.subr.mxu0 0.0
        %793 = vmatpush2.xpose.msra.mxu0 0.0
        %794 = vmatprep.subr.mxu0 0.0
        %795 = vmatpush2.xpose.msra.mxu0 0.0
        %796 = vmatprep.subr.mxu0 0.0
        %797 = vmatpush2.xpose.msra.mxu0 0.0
        %798 = vmatprep.subr.mxu0 0.0
        %799 = vmatpush2.xpose.msra.mxu0 0.0
        %800 = vmatprep.mubr.f32.mxu0 0.0
        %801 = vmatmul.mubr.f32.gmra.mxu0 %v704
        %v802 = vpop.f32.mrf.mxu0
        %v803 = vadd.f32 0.0, %v802
        %v804 = vpop.f32.mrf.mxu0
        %805 = vmatprep.mubr.f32.mxu0 0.0
        %806 = vmatmul.mubr.f32.gmra.mxu0 %v706
        %v807 = vpop.f32.mrf.mxu0
        %v808 = vadd.f32 0.0, %v807
        %v809 = vpop.f32.mrf.mxu0
        %810 = vmatprep.mubr.f32.mxu0 0.0
        %811 = vmatmul.mubr.f32.gmra.mxu0 %v708
        %v812 = vpop.f32.mrf.mxu0
        %v813 = vadd.f32 0.0, %v812
        %v814 = vpop.f32.mrf.mxu0
        %815 = vmatprep.mubr.f32.mxu0 0.0
        %816 = vmatmul.mubr.f32.gmra.mxu0 %v710
        %v817 = vpop.f32.mrf.mxu0
        %v818 = vadd.f32 0.0, %v817
        %v819 = vpop.f32.mrf.mxu0
        %820 = vmatprep.mubr.f32.mxu0 0.0
        %821 = vmatmul.mubr.f32.gmra.mxu0 %v712
        %v822 = vpop.f32.mrf.mxu0
        %v823 = vadd.f32 0.0, %v822
        %v824 = vpop.f32.mrf.mxu0
        %825 = vmatprep.mubr.f32.mxu0 0.0
        %826 = vmatmul.mubr.f32.gmra.mxu0 %v714
        %v827 = vpop.f32.mrf.mxu0
        %v828 = vadd.f32 0.0, %v827
        %v829 = vpop.f32.mrf.mxu0
        %830 = vmatprep.mubr.f32.mxu0 0.0
        %831 = vmatmul.mubr.f32.gmra.mxu0 %v716
        %v832 = vpop.f32.mrf.mxu0
        %v833 = vadd.f32 0.0, %v832
        %v834 = vpop.f32.mrf.mxu0
        %835 = vmatprep.mubr.f32.mxu0 0.0
        %836 = vmatmul.mubr.f32.gmra.mxu0 %v718
        %v837 = vpop.f32.mrf.mxu0
        %v838 = vadd.f32 0.0, %v837
        %v839 = vpop.f32.mrf.mxu0
        %840 = vdwg.mxu0
        %v841 = vmul.f32 %v803, 0.25
        %v842 = vmul.f32 %v808, 0.25
        %v843 = vmul.f32 %v813, 0.25
        %v844 = vmul.f32 %v818, 0.25
        %v845 = vmul.f32 %v823, 0.25
        %v846 = vmul.f32 %v828, 0.25
        %v847 = vmul.f32 %v833, 0.25
        %v848 = vmul.f32 %v838, 0.25
        %v849 = vsel %vm593, %v841, -inf
        %850 = vmax.xlane.f32.xlu0 %v849
        %v851 = vpop.xlane.xlu0 %850
        %v852 = vsel %vm593, %v842, -inf
        %853 = vmax.xlane.f32.xlu0 %v852
        %v854 = vpop.xlane.xlu0 %853
        %v855 = vsel %vm593, %v843, -inf
        %856 = vmax.xlane.f32.xlu0 %v855
        %v857 = vpop.xlane.xlu0 %856
        %v858 = vsel %vm593, %v844, -inf
        %859 = vmax.xlane.f32.xlu0 %v858
        %v860 = vpop.xlane.xlu0 %859
        %v861 = vsel %vm593, %v845, -inf
        %862 = vmax.xlane.f32.xlu0 %v861
        %v863 = vpop.xlane.xlu0 %862
        %v864 = vsel %vm593, %v846, -inf
        %865 = vmax.xlane.f32.xlu0 %v864
        %v866 = vpop.xlane.xlu0 %865
        %v867 = vsel %vm593, %v847, -inf
        %868 = vmax.xlane.f32.xlu0 %v867
        %v869 = vpop.xlane.xlu0 %868
        %v870 = vsel %vm593, %v848, -inf
        %871 = vmax.xlane.f32.xlu0 %v870
        %v872 = vpop.xlane.xlu0 %871
        %v873 = vsub.f32 %v841, %v851
        %v874 = vsub.f32 %v842, %v854
        %v875 = vsub.f32 %v843, %v857
        %v876 = vsub.f32 %v844, %v860
        %v877 = vsub.f32 %v845, %v863
        %v878 = vsub.f32 %v846, %v866
        %v879 = vsub.f32 %v847, %v869
        %v880 = vsub.f32 %v848, %v872
        %v881 = vmul.f32 %v873, 1.442695
        %v882 = vpow.pop %v881
        %v883 = vmul.f32 %v874, 1.442695
        %v884 = vpow.pop %v883
        %v885 = vmul.f32 %v875, 1.442695
        %v886 = vpow.pop %v885
        %v887 = vmul.f32 %v876, 1.442695
        %v888 = vpow.pop %v887
        %v889 = vmul.f32 %v877, 1.442695
        %v890 = vpow.pop %v889
        %v891 = vmul.f32 %v878, 1.442695
        %v892 = vpow.pop %v891
        %v893 = vmul.f32 %v879, 1.442695
        %v894 = vpow.pop %v893
        %v895 = vmul.f32 %v880, 1.442695
        %v896 = vpow.pop %v895
        %v897 = vsel %vm593, %v882, 0.0
        %898 = vadd.xlane.f32.xlu0 %v897
        %v899 = vpop.xlane.xlu0 %898
        %v900 = vsel %vm593, %v884, 0.0
        %901 = vadd.xlane.f32.xlu0 %v900
        %v902 = vpop.xlane.xlu0 %901
        %v903 = vsel %vm593, %v886, 0.0
        %904 = vadd.xlane.f32.xlu0 %v903
        %v905 = vpop.xlane.xlu0 %904
        %v906 = vsel %vm593, %v888, 0.0
        %907 = vadd.xlane.f32.xlu0 %v906
        %v908 = vpop.xlane.xlu0 %907
        %v909 = vsel %vm593, %v890, 0.0
        %910 = vadd.xlane.f32.xlu0 %v909
        %v911 = vpop.xlane.xlu0 %910
        %v912 = vsel %vm593, %v892, 0.0
        %913 = vadd.xlane.f32.xlu0 %v912
        %v914 = vpop.xlane.xlu0 %913
        %v915 = vsel %vm593, %v894, 0.0
        %916 = vadd.xlane.f32.xlu0 %v915
        %v917 = vpop.xlane.xlu0 %916
        %v918 = vsel %vm593, %v896, 0.0
        %919 = vadd.xlane.f32.xlu0 %v918
        %v920 = vpop.xlane.xlu0 %919
        %v921 = vrcp.pop %v899
        %v922 = vrcp.pop %v902
        %v923 = vrcp.pop %v905
        %v924 = vrcp.pop %v908
        %v925 = vrcp.pop %v911
        %v926 = vrcp.pop %v914
        %v927 = vrcp.pop %v917
        %v928 = vrcp.pop %v920
        %v929 = vmul.f32 %v882, %v921
        %v930 = vmul.f32 %v884, %v922
        %v931 = vmul.f32 %v886, %v923
        %v932 = vmul.f32 %v888, %v924
        %v933 = vmul.f32 %v890, %v925
        %v934 = vmul.f32 %v892, %v926
        %v935 = vmul.f32 %v894, %v927
        %v936 = vmul.f32 %v896, %v928
        %v938 = vsel %vm593, %v929, 0
        %v941 = vsel %vm593, %v930, 0
        %v944 = vsel %vm593, %v931, 0
        %v947 = vsel %vm593, %v932, 0
        %v950 = vsel %vm593, %v933, 0
        %v953 = vsel %vm593, %v934, 0
        %v956 = vsel %vm593, %v935, 0
        %v959 = vsel %vm593, %v936, 0
        %961 = vmatprep.subr.mxu0 0.0
        %962 = vmatpush1.msra.mxu0 0.0
        %963 = vmatprep.subr.mxu0 0.0
        %964 = vmatpush1.msra.mxu0 0.0
        %965 = vmatprep.subr.mxu0 0.0
        %966 = vmatpush1.msra.mxu0 0.0
        %967 = vmatprep.subr.mxu0 0.0
        %968 = vmatpush1.msra.mxu0 0.0
        %969 = vmatprep.subr.mxu0 0.0
        %970 = vmatpush1.msra.mxu0 0.0
        %971 = vmatprep.subr.mxu0 0.0
        %972 = vmatpush1.msra.mxu0 0.0
        %973 = vmatprep.subr.mxu0 0.0
        %974 = vmatpush1.msra.mxu0 0.0
        %975 = vmatprep.subr.mxu0 0.0
        %976 = vmatpush1.msra.mxu0 0.0
        %977 = vmatprep.subr.mxu0 0.0
        %978 = vmatpush1.msra.mxu0 %v677
        %979 = vmatprep.subr.mxu0 0.0
        %980 = vmatpush1.msra.mxu0 %v673
        %981 = vmatprep.subr.mxu0 0.0
        %982 = vmatpush1.msra.mxu0 %v667
        %983 = vmatprep.subr.mxu0 0.0
        %984 = vmatpush1.msra.mxu0 %v663
        %985 = vmatprep.subr.mxu0 0.0
        %986 = vmatpush1.msra.mxu0 %v657
        %987 = vmatprep.subr.mxu0 0.0
        %988 = vmatpush1.msra.mxu0 %v653
        %989 = vmatprep.subr.mxu0 0.0
        %990 = vmatpush1.msra.mxu0 %v647
        %991 = vmatprep.subr.mxu0 0.0
        %992 = vmatpush1.msra.mxu0 %v643
        %993 = vmatprep.subr.mxu0 0.0
        %994 = vmatpush2.msra.mxu0 0.0
        %995 = vmatprep.subr.mxu0 0.0
        %996 = vmatpush2.msra.mxu0 0.0
        %997 = vmatprep.subr.mxu0 0.0
        %998 = vmatpush2.msra.mxu0 0.0
        %999 = vmatprep.subr.mxu0 0.0
        %1000 = vmatpush2.msra.mxu0 0.0
        %1001 = vmatprep.subr.mxu0 0.0
        %1002 = vmatpush2.msra.mxu0 0.0
        %1003 = vmatprep.subr.mxu0 0.0
        %1004 = vmatpush2.msra.mxu0 0.0
        %1005 = vmatprep.subr.mxu0 0.0
        %1006 = vmatpush2.msra.mxu0 0.0
        %1007 = vmatprep.subr.mxu0 0.0
        %1008 = vmatpush2.msra.mxu0 0.0
        %1009 = vmatprep.subr.mxu0 0.0
        %1010 = vmatpush2.msra.mxu0 0.0
        %1011 = vmatprep.subr.mxu0 0.0
        %1012 = vmatpush2.msra.mxu0 0.0
        %1013 = vmatprep.subr.mxu0 0.0
        %1014 = vmatpush2.msra.mxu0 0.0
        %1015 = vmatprep.subr.mxu0 0.0
        %1016 = vmatpush2.msra.mxu0 0.0
        %1017 = vmatprep.subr.mxu0 0.0
        %1018 = vmatpush2.msra.mxu0 0.0
        %1019 = vmatprep.subr.mxu0 0.0
        %1020 = vmatpush2.msra.mxu0 0.0
        %1021 = vmatprep.subr.mxu0 0.0
        %1022 = vmatpush2.msra.mxu0 0.0
        %1023 = vmatprep.subr.mxu0 0.0
        %1024 = vmatpush2.msra.mxu0 0.0
        %1025 = vmatprep.mubr.f32.mxu0 0.0
        %1026 = vmatmul.mubr.f32.gmra.mxu0 %v938
        %v1027 = vpop.f32.mrf.mxu0
        %v1028 = vadd.f32 0.0, %v1027
        %v1029 = vpop.f32.mrf.mxu0
        %1030 = vmatprep.mubr.f32.mxu0 0.0
        %1031 = vmatmul.mubr.f32.gmra.mxu0 %v941
        %v1032 = vpop.f32.mrf.mxu0
        %v1033 = vadd.f32 0.0, %v1032
        %v1034 = vpop.f32.mrf.mxu0
        %1035 = vmatprep.mubr.f32.mxu0 0.0
        %1036 = vmatmul.mubr.f32.gmra.mxu0 %v944
        %v1037 = vpop.f32.mrf.mxu0
        %v1038 = vadd.f32 0.0, %v1037
        %v1039 = vpop.f32.mrf.mxu0
        %1040 = vmatprep.mubr.f32.mxu0 0.0
        %1041 = vmatmul.mubr.f32.gmra.mxu0 %v947
        %v1042 = vpop.f32.mrf.mxu0
        %v1043 = vadd.f32 0.0, %v1042
        %v1044 = vpop.f32.mrf.mxu0
        %1045 = vmatprep.mubr.f32.mxu0 0.0
        %1046 = vmatmul.mubr.f32.gmra.mxu0 %v950
        %v1047 = vpop.f32.mrf.mxu0
        %v1048 = vadd.f32 0.0, %v1047
        %v1049 = vpop.f32.mrf.mxu0
        %1050 = vmatprep.mubr.f32.mxu0 0.0
        %1051 = vmatmul.mubr.f32.gmra.mxu0 %v953
        %v1052 = vpop.f32.mrf.mxu0
        %v1053 = vadd.f32 0.0, %v1052
        %v1054 = vpop.f32.mrf.mxu0
        %1055 = vmatprep.mubr.f32.mxu0 0.0
        %1056 = vmatmul.mubr.f32.gmra.mxu0 %v956
        %v1057 = vpop.f32.mrf.mxu0
        %v1058 = vadd.f32 0.0, %v1057
        %v1059 = vpop.f32.mrf.mxu0
        %1060 = vmatprep.mubr.f32.mxu0 0.0
        %1061 = vmatmul.mubr.f32.gmra.mxu0 %v959
        %v1062 = vpop.f32.mrf.mxu0
        %v1063 = vadd.f32 0.0, %v1062
        %v1064 = vpop.f32.mrf.mxu0
        %1065 = vdwg.mxu0
        %1066 = vrot.lane.b32.xlu0 %v641, 112
        %v1067 = vpop.permute.xlu0 %1066
        %1068 = vrot.lane.b32.xlu0 %v645, 112
        %v1069 = vpop.permute.xlu0 %1068
        %1070 = vrot.lane.b32.xlu0 %v651, 112
        %v1071 = vpop.permute.xlu0 %1070
        %1072 = vrot.lane.b32.xlu0 %v655, 112
        %v1073 = vpop.permute.xlu0 %1072
        %1074 = vrot.lane.b32.xlu0 %v661, 112
        %v1075 = vpop.permute.xlu0 %1074
        %1076 = vrot.lane.b32.xlu0 %v665, 112
        %v1077 = vpop.permute.xlu0 %1076
        %1078 = vrot.lane.b32.xlu0 %v671, 112
        %v1079 = vpop.permute.xlu0 %1078
        %1080 = vrot.lane.b32.xlu0 %v675, 112
        %v1081 = vpop.permute.xlu0 %1080
        %1082 = vrot.lane.b32.xlu0 %v641, 48
        %v1083 = vpop.permute.xlu0 %1082
        %1084 = vrot.lane.b32.xlu0 %v645, 48
        %v1085 = vpop.permute.xlu0 %1084
        %1086 = vrot.lane.b32.xlu0 %v651, 48
        %v1087 = vpop.permute.xlu0 %1086
        %1088 = vrot.lane.b32.xlu0 %v655, 48
        %v1089 = vpop.permute.xlu0 %1088
        %1090 = vrot.lane.b32.xlu0 %v661, 48
        %v1091 = vpop.permute.xlu0 %1090
        %1092 = vrot.lane.b32.xlu0 %v665, 48
        %v1093 = vpop.permute.xlu0 %1092
        %1094 = vrot.lane.b32.xlu0 %v671, 48
        %v1095 = vpop.permute.xlu0 %1094
        %1096 = vrot.lane.b32.xlu0 %v675, 48
        %v1097 = vpop.permute.xlu0 %1096
        %v1098 = vsel %vm703, %v1067, 0
        %v1100 = vsel %vm703, %v1069, 0
        %v1102 = vsel %vm703, %v1071, 0
        %v1104 = vsel %vm703, %v1073, 0
        %v1106 = vsel %vm703, %v1075, 0
        %v1108 = vsel %vm703, %v1077, 0
        %v1110 = vsel %vm703, %v1079, 0
        %v1112 = vsel %vm703, %v1081, 0
        %v1114 = vsel %vm703, %v1083, 0
        %v1116 = vsel %vm703, %v1085, 0
        %v1118 = vsel %vm703, %v1087, 0
        %v1120 = vsel %vm703, %v1089, 0
        %v1122 = vsel %vm703, %v1091, 0
        %v1124 = vsel %vm703, %v1093, 0
        %v1126 = vsel %vm703, %v1095, 0
        %v1128 = vsel %vm703, %v1097, 0
        %1130 = vmatprep.subr.mxu0 0.0
        %1131 = vmatpush1.xpose.msra.mxu0 0.0
        %1132 = vmatprep.subr.mxu0 0.0
        %1133 = vmatpush1.xpose.msra.mxu0 0.0
        %1134 = vmatprep.subr.mxu0 0.0
        %1135 = vmatpush1.xpose.msra.mxu0 0.0
        %1136 = vmatprep.subr.mxu0 0.0
        %1137 = vmatpush1.xpose.msra.mxu0 0.0
        %1138 = vmatprep.subr.mxu0 0.0
        %1139 = vmatpush1.xpose.msra.mxu0 0.0
        %1140 = vmatprep.subr.mxu0 0.0
        %1141 = vmatpush1.xpose.msra.mxu0 0.0
        %1142 = vmatprep.subr.mxu0 0.0
        %1143 = vmatpush1.xpose.msra.mxu0 0.0
        %1144 = vmatprep.subr.mxu0 0.0
        %1145 = vmatpush1.xpose.msra.mxu0 0.0
        %1146 = vmatprep.subr.mxu0 0.0
        %1147 = vmatpush1.xpose.msra.mxu0 %v1128
        %1148 = vmatprep.subr.mxu0 0.0
        %1149 = vmatpush1.xpose.msra.mxu0 %v1126
        %1150 = vmatprep.subr.mxu0 0.0
        %1151 = vmatpush1.xpose.msra.mxu0 %v1124
        %1152 = vmatprep.subr.mxu0 0.0
        %1153 = vmatpush1.xpose.msra.mxu0 %v1122
        %1154 = vmatprep.subr.mxu0 0.0
        %1155 = vmatpush1.xpose.msra.mxu0 %v1120
        %1156 = vmatprep.subr.mxu0 0.0
        %1157 = vmatpush1.xpose.msra.mxu0 %v1118
        %1158 = vmatprep.subr.mxu0 0.0
        %1159 = vmatpush1.xpose.msra.mxu0 %v1116
        %1160 = vmatprep.subr.mxu0 0.0
        %1161 = vmatpush1.xpose.msra.mxu0 %v1114
        %1162 = vmatprep.subr.mxu0 0.0
        %1163 = vmatpush2.xpose.msra.mxu0 0.0
        %1164 = vmatprep.subr.mxu0 0.0
        %1165 = vmatpush2.xpose.msra.mxu0 0.0
        %1166 = vmatprep.subr.mxu0 0.0
        %1167 = vmatpush2.xpose.msra.mxu0 0.0
        %1168 = vmatprep.subr.mxu0 0.0
        %1169 = vmatpush2.xpose.msra.mxu0 0.0
        %1170 = vmatprep.subr.mxu0 0.0
        %1171 = vmatpush2.xpose.msra.mxu0 0.0
        %1172 = vmatprep.subr.mxu0 0.0
        %1173 = vmatpush2.xpose.msra.mxu0 0.0
        %1174 = vmatprep.subr.mxu0 0.0
        %1175 = vmatpush2.xpose.msra.mxu0 0.0
        %1176 = vmatprep.subr.mxu0 0.0
        %1177 = vmatpush2.xpose.msra.mxu0 0.0
        %1178 = vmatprep.subr.mxu0 0.0
        %1179 = vmatpush2.xpose.msra.mxu0 0.0
        %1180 = vmatprep.subr.mxu0 0.0
        %1181 = vmatpush2.xpose.msra.mxu0 0.0
        %1182 = vmatprep.subr.mxu0 0.0
        %1183 = vmatpush2.xpose.msra.mxu0 0.0
        %1184 = vmatprep.subr.mxu0 0.0
        %1185 = vmatpush2.xpose.msra.mxu0 0.0
        %1186 = vmatprep.subr.mxu0 0.0
        %1187 = vmatpush2.xpose.msra.mxu0 0.0
        %1188 = vmatprep.subr.mxu0 0.0
        %1189 = vmatpush2.xpose.msra.mxu0 0.0
        %1190 = vmatprep.subr.mxu0 0.0
        %1191 = vmatpush2.xpose.msra.mxu0 0.0
        %1192 = vmatprep.subr.mxu0 0.0
        %1193 = vmatpush2.xpose.msra.mxu0 0.0
        %1194 = vmatprep.mubr.f32.mxu0 0.0
        %1195 = vmatmul.mubr.f32.gmra.mxu0 %v1098
        %v1196 = vpop.f32.mrf.mxu0
        %v1197 = vadd.f32 0.0, %v1196
        %v1198 = vpop.f32.mrf.mxu0
        %1199 = vmatprep.mubr.f32.mxu0 0.0
        %1200 = vmatmul.mubr.f32.gmra.mxu0 %v1100
        %v1201 = vpop.f32.mrf.mxu0
        %v1202 = vadd.f32 0.0, %v1201
        %v1203 = vpop.f32.mrf.mxu0
        %1204 = vmatprep.mubr.f32.mxu0 0.0
        %1205 = vmatmul.mubr.f32.gmra.mxu0 %v1102
        %v1206 = vpop.f32.mrf.mxu0
        %v1207 = vadd.f32 0.0, %v1206
        %v1208 = vpop.f32.mrf.mxu0
        %1209 = vmatprep.mubr.f32.mxu0 0.0
        %1210 = vmatmul.mubr.f32.gmra.mxu0 %v1104
        %v1211 = vpop.f32.mrf.mxu0
        %v1212 = vadd.f32 0.0, %v1211
        %v1213 = vpop.f32.mrf.mxu0
        %1214 = vmatprep.mubr.f32.mxu0 0.0
        %1215 = vmatmul.mubr.f32.gmra.mxu0 %v1106
        %v1216 = vpop.f32.mrf.mxu0
        %v1217 = vadd.f32 0.0, %v1216
        %v1218 = vpop.f32.mrf.mxu0
        %1219 = vmatprep.mubr.f32.mxu0 0.0
        %1220 = vmatmul.mubr.f32.gmra.mxu0 %v1108
        %v1221 = vpop.f32.mrf.mxu0
        %v1222 = vadd.f32 0.0, %v1221
        %v1223 = vpop.f32.mrf.mxu0
        %1224 = vmatprep.mubr.f32.mxu0 0.0
        %1225 = vmatmul.mubr.f32.gmra.mxu0 %v1110
        %v1226 = vpop.f32.mrf.mxu0
        %v1227 = vadd.f32 0.0, %v1226
        %v1228 = vpop.f32.mrf.mxu0
        %1229 = vmatprep.mubr.f32.mxu0 0.0
        %1230 = vmatmul.mubr.f32.gmra.mxu0 %v1112
        %v1231 = vpop.f32.mrf.mxu0
        %v1232 = vadd.f32 0.0, %v1231
        %v1233 = vpop.f32.mrf.mxu0
        %1234 = vdwg.mxu0
        %v1235 = vmul.f32 %v1197, 0.25
        %v1236 = vmul.f32 %v1202, 0.25
        %v1237 = vmul.f32 %v1207, 0.25
        %v1238 = vmul.f32 %v1212, 0.25
        %v1239 = vmul.f32 %v1217, 0.25
        %v1240 = vmul.f32 %v1222, 0.25
        %v1241 = vmul.f32 %v1227, 0.25
        %v1242 = vmul.f32 %v1232, 0.25
        %v1243 = vsel %vm593, %v1235, -inf
        %1244 = vmax.xlane.f32.xlu0 %v1243
        %v1245 = vpop.xlane.xlu0 %1244
        %v1246 = vsel %vm593, %v1236, -inf
        %1247 = vmax.xlane.f32.xlu0 %v1246
        %v1248 = vpop.xlane.xlu0 %1247
        %v1249 = vsel %vm593, %v1237, -inf
        %1250 = vmax.xlane.f32.xlu0 %v1249
        %v1251 = vpop.xlane.xlu0 %1250
        %v1252 = vsel %vm593, %v1238, -inf
        %1253 = vmax.xlane.f32.xlu0 %v1252
        %v1254 = vpop.xlane.xlu0 %1253
        %v1255 = vsel %vm593, %v1239, -inf
        %1256 = vmax.xlane.f32.xlu0 %v1255
        %v1257 = vpop.xlane.xlu0 %1256
        %v1258 = vsel %vm593, %v1240, -inf
        %1259 = vmax.xlane.f32.xlu0 %v1258
        %v1260 = vpop.xlane.xlu0 %1259
        %v1261 = vsel %vm593, %v1241, -inf
        %1262 = vmax.xlane.f32.xlu0 %v1261
        %v1263 = vpop.xlane.xlu0 %1262
        %v1264 = vsel %vm593, %v1242, -inf
        %1265 = vmax.xlane.f32.xlu0 %v1264
        %v1266 = vpop.xlane.xlu0 %1265
        %v1267 = vsub.f32 %v1235, %v1245
        %v1268 = vsub.f32 %v1236, %v1248
        %v1269 = vsub.f32 %v1237, %v1251
        %v1270 = vsub.f32 %v1238, %v1254
        %v1271 = vsub.f32 %v1239, %v1257
        %v1272 = vsub.f32 %v1240, %v1260
        %v1273 = vsub.f32 %v1241, %v1263
        %v1274 = vsub.f32 %v1242, %v1266
        %v1275 = vmul.f32 %v1267, 1.442695
        %v1276 = vpow.pop %v1275
        %v1277 = vmul.f32 %v1268, 1.442695
        %v1278 = vpow.pop %v1277
        %v1279 = vmul.f32 %v1269, 1.442695
        %v1280 = vpow.pop %v1279
        %v1281 = vmul.f32 %v1270, 1.442695
        %v1282 = vpow.pop %v1281
        %v1283 = vmul.f32 %v1271, 1.442695
        %v1284 = vpow.pop %v1283
        %v1285 = vmul.f32 %v1272, 1.442695
        %v1286 = vpow.pop %v1285
        %v1287 = vmul.f32 %v1273, 1.442695
        %v1288 = vpow.pop %v1287
        %v1289 = vmul.f32 %v1274, 1.442695
        %v1290 = vpow.pop %v1289
        %v1291 = vsel %vm593, %v1276, 0.0
        %1292 = vadd.xlane.f32.xlu0 %v1291
        %v1293 = vpop.xlane.xlu0 %1292
        %v1294 = vsel %vm593, %v1278, 0.0
        %1295 = vadd.xlane.f32.xlu0 %v1294
        %v1296 = vpop.xlane.xlu0 %1295
        %v1297 = vsel %vm593, %v1280, 0.0
        %1298 = vadd.xlane.f32.xlu0 %v1297
        %v1299 = vpop.xlane.xlu0 %1298
        %v1300 = vsel %vm593, %v1282, 0.0
        %1301 = vadd.xlane.f32.xlu0 %v1300
        %v1302 = vpop.xlane.xlu0 %1301
        %v1303 = vsel %vm593, %v1284, 0.0
        %1304 = vadd.xlane.f32.xlu0 %v1303
        %v1305 = vpop.xlane.xlu0 %1304
        %v1306 = vsel %vm593, %v1286, 0.0
        %1307 = vadd.xlane.f32.xlu0 %v1306
        %v1308 = vpop.xlane.xlu0 %1307
        %v1309 = vsel %vm593, %v1288, 0.0
        %1310 = vadd.xlane.f32.xlu0 %v1309
        %v1311 = vpop.xlane.xlu0 %1310
        %v1312 = vsel %vm593, %v1290, 0.0
        %1313 = vadd.xlane.f32.xlu0 %v1312
        %v1314 = vpop.xlane.xlu0 %1313
        %v1315 = vrcp.pop %v1293
        %v1316 = vrcp.pop %v1296
        %v1317 = vrcp.pop %v1299
        %v1318 = vrcp.pop %v1302
        %v1319 = vrcp.pop %v1305
        %v1320 = vrcp.pop %v1308
        %v1321 = vrcp.pop %v1311
        %v1322 = vrcp.pop %v1314
        %v1323 = vmul.f32 %v1276, %v1315
        %v1324 = vmul.f32 %v1278, %v1316
        %v1325 = vmul.f32 %v1280, %v1317
        %v1326 = vmul.f32 %v1282, %v1318
        %v1327 = vmul.f32 %v1284, %v1319
        %v1328 = vmul.f32 %v1286, %v1320
        %v1329 = vmul.f32 %v1288, %v1321
        %v1330 = vmul.f32 %v1290, %v1322
        %1339 = vrot.lane.b32.xlu0 %v643, 112
        %v1340 = vpop.permute.xlu0 %1339
        %1341 = vrot.lane.b32.xlu0 %v647, 112
        %v1342 = vpop.permute.xlu0 %1341
        %1343 = vrot.lane.b32.xlu0 %v653, 112
        %v1344 = vpop.permute.xlu0 %1343
        %1345 = vrot.lane.b32.xlu0 %v657, 112
        %v1346 = vpop.permute.xlu0 %1345
        %1347 = vrot.lane.b32.xlu0 %v663, 112
        %v1348 = vpop.permute.xlu0 %1347
        %1349 = vrot.lane.b32.xlu0 %v667, 112
        %v1350 = vpop.permute.xlu0 %1349
        %1351 = vrot.lane.b32.xlu0 %v673, 112
        %v1352 = vpop.permute.xlu0 %1351
        %1353 = vrot.lane.b32.xlu0 %v677, 112
        %v1354 = vpop.permute.xlu0 %1353
        %v1364 = vsel %vm593, %v1323, 0
        %v1367 = vsel %vm593, %v1324, 0
        %v1370 = vsel %vm593, %v1325, 0
        %v1373 = vsel %vm593, %v1326, 0
        %v1376 = vsel %vm593, %v1327, 0
        %v1379 = vsel %vm593, %v1328, 0
        %v1382 = vsel %vm593, %v1329, 0
        %v1385 = vsel %vm593, %v1330, 0
        %1387 = vmatprep.subr.mxu0 0.0
        %1388 = vmatpush1.msra.mxu0 0.0
        %1389 = vmatprep.subr.mxu0 0.0
        %1390 = vmatpush1.msra.mxu0 0.0
        %1391 = vmatprep.subr.mxu0 0.0
        %1392 = vmatpush1.msra.mxu0 0.0
        %1393 = vmatprep.subr.mxu0 0.0
        %1394 = vmatpush1.msra.mxu0 0.0
        %1395 = vmatprep.subr.mxu0 0.0
        %1396 = vmatpush1.msra.mxu0 0.0
        %1397 = vmatprep.subr.mxu0 0.0
        %1398 = vmatpush1.msra.mxu0 0.0
        %1399 = vmatprep.subr.mxu0 0.0
        %1400 = vmatpush1.msra.mxu0 0.0
        %1401 = vmatprep.subr.mxu0 0.0
        %1402 = vmatpush1.msra.mxu0 0.0
        %1403 = vmatprep.subr.mxu0 0.0
        %1404 = vmatpush1.msra.mxu0 %v1354
        %1405 = vmatprep.subr.mxu0 0.0
        %1406 = vmatpush1.msra.mxu0 %v1352
        %1407 = vmatprep.subr.mxu0 0.0
        %1408 = vmatpush1.msra.mxu0 %v1350
        %1409 = vmatprep.subr.mxu0 0.0
        %1410 = vmatpush1.msra.mxu0 %v1348
        %1411 = vmatprep.subr.mxu0 0.0
        %1412 = vmatpush1.msra.mxu0 %v1346
        %1413 = vmatprep.subr.mxu0 0.0
        %1414 = vmatpush1.msra.mxu0 %v1344
        %1415 = vmatprep.subr.mxu0 0.0
        %1416 = vmatpush1.msra.mxu0 %v1342
        %1417 = vmatprep.subr.mxu0 0.0
        %1418 = vmatpush1.msra.mxu0 %v1340
        %1419 = vmatprep.subr.mxu0 0.0
        %1420 = vmatpush2.msra.mxu0 0.0
        %1421 = vmatprep.subr.mxu0 0.0
        %1422 = vmatpush2.msra.mxu0 0.0
        %1423 = vmatprep.subr.mxu0 0.0
        %1424 = vmatpush2.msra.mxu0 0.0
        %1425 = vmatprep.subr.mxu0 0.0
        %1426 = vmatpush2.msra.mxu0 0.0
        %1427 = vmatprep.subr.mxu0 0.0
        %1428 = vmatpush2.msra.mxu0 0.0
        %1429 = vmatprep.subr.mxu0 0.0
        %1430 = vmatpush2.msra.mxu0 0.0
        %1431 = vmatprep.subr.mxu0 0.0
        %1432 = vmatpush2.msra.mxu0 0.0
        %1433 = vmatprep.subr.mxu0 0.0
        %1434 = vmatpush2.msra.mxu0 0.0
        %1435 = vmatprep.subr.mxu0 0.0
        %1436 = vmatpush2.msra.mxu0 0.0
        %1437 = vmatprep.subr.mxu0 0.0
        %1438 = vmatpush2.msra.mxu0 0.0
        %1439 = vmatprep.subr.mxu0 0.0
        %1440 = vmatpush2.msra.mxu0 0.0
        %1441 = vmatprep.subr.mxu0 0.0
        %1442 = vmatpush2.msra.mxu0 0.0
        %1443 = vmatprep.subr.mxu0 0.0
        %1444 = vmatpush2.msra.mxu0 0.0
        %1445 = vmatprep.subr.mxu0 0.0
        %1446 = vmatpush2.msra.mxu0 0.0
        %1447 = vmatprep.subr.mxu0 0.0
        %1448 = vmatpush2.msra.mxu0 0.0
        %1449 = vmatprep.subr.mxu0 0.0
        %1450 = vmatpush2.msra.mxu0 0.0
        %1451 = vmatprep.mubr.f32.mxu0 0.0
        %1452 = vmatmul.mubr.f32.gmra.mxu0 %v1364
        %v1453 = vpop.f32.mrf.mxu0
        %v1454 = vadd.f32 0.0, %v1453
        %v1455 = vpop.f32.mrf.mxu0
        %1456 = vmatprep.mubr.f32.mxu0 0.0
        %1457 = vmatmul.mubr.f32.gmra.mxu0 %v1367
        %v1458 = vpop.f32.mrf.mxu0
        %v1459 = vadd.f32 0.0, %v1458
        %v1460 = vpop.f32.mrf.mxu0
        %1461 = vmatprep.mubr.f32.mxu0 0.0
        %1462 = vmatmul.mubr.f32.gmra.mxu0 %v1370
        %v1463 = vpop.f32.mrf.mxu0
        %v1464 = vadd.f32 0.0, %v1463
        %v1465 = vpop.f32.mrf.mxu0
        %1466 = vmatprep.mubr.f32.mxu0 0.0
        %1467 = vmatmul.mubr.f32.gmra.mxu0 %v1373
        %v1468 = vpop.f32.mrf.mxu0
        %v1469 = vadd.f32 0.0, %v1468
        %v1470 = vpop.f32.mrf.mxu0
        %1471 = vmatprep.mubr.f32.mxu0 0.0
        %1472 = vmatmul.mubr.f32.gmra.mxu0 %v1376
        %v1473 = vpop.f32.mrf.mxu0
        %v1474 = vadd.f32 0.0, %v1473
        %v1475 = vpop.f32.mrf.mxu0
        %1476 = vmatprep.mubr.f32.mxu0 0.0
        %1477 = vmatmul.mubr.f32.gmra.mxu0 %v1379
        %v1478 = vpop.f32.mrf.mxu0
        %v1479 = vadd.f32 0.0, %v1478
        %v1480 = vpop.f32.mrf.mxu0
        %1481 = vmatprep.mubr.f32.mxu0 0.0
        %1482 = vmatmul.mubr.f32.gmra.mxu0 %v1382
        %v1483 = vpop.f32.mrf.mxu0
        %v1484 = vadd.f32 0.0, %v1483
        %v1485 = vpop.f32.mrf.mxu0
        %1486 = vmatprep.mubr.f32.mxu0 0.0
        %1487 = vmatmul.mubr.f32.gmra.mxu0 %v1385
        %v1488 = vpop.f32.mrf.mxu0
        %v1489 = vadd.f32 0.0, %v1488
        %v1490 = vpop.f32.mrf.mxu0
        %1491 = vdwg.mxu0
        %1492 = vrot.lane.b32.xlu0 %v641, 96
        %v1493 = vpop.permute.xlu0 %1492
        %1494 = vrot.lane.b32.xlu0 %v645, 96
        %v1495 = vpop.permute.xlu0 %1494
        %1496 = vrot.lane.b32.xlu0 %v651, 96
        %v1497 = vpop.permute.xlu0 %1496
        %1498 = vrot.lane.b32.xlu0 %v655, 96
        %v1499 = vpop.permute.xlu0 %1498
        %1500 = vrot.lane.b32.xlu0 %v661, 96
        %v1501 = vpop.permute.xlu0 %1500
        %1502 = vrot.lane.b32.xlu0 %v665, 96
        %v1503 = vpop.permute.xlu0 %1502
        %1504 = vrot.lane.b32.xlu0 %v671, 96
        %v1505 = vpop.permute.xlu0 %1504
        %1506 = vrot.lane.b32.xlu0 %v675, 96
        %v1507 = vpop.permute.xlu0 %1506
        %1508 = vrot.lane.b32.xlu0 %v641, 32
        %v1509 = vpop.permute.xlu0 %1508
        %1510 = vrot.lane.b32.xlu0 %v645, 32
        %v1511 = vpop.permute.xlu0 %1510
        %1512 = vrot.lane.b32.xlu0 %v651, 32
        %v1513 = vpop.permute.xlu0 %1512
        %1514 = vrot.lane.b32.xlu0 %v655, 32
        %v1515 = vpop.permute.xlu0 %1514
        %1516 = vrot.lane.b32.xlu0 %v661, 32
        %v1517 = vpop.permute.xlu0 %1516
        %1518 = vrot.lane.b32.xlu0 %v665, 32
        %v1519 = vpop.permute.xlu0 %1518
        %1520 = vrot.lane.b32.xlu0 %v671, 32
        %v1521 = vpop.permute.xlu0 %1520
        %1522 = vrot.lane.b32.xlu0 %v675, 32
        %v1523 = vpop.permute.xlu0 %1522
        %v1524 = vsel %vm703, %v1493, 0
        %v1526 = vsel %vm703, %v1495, 0
        %v1528 = vsel %vm703, %v1497, 0
        %v1530 = vsel %vm703, %v1499, 0
        %v1532 = vsel %vm703, %v1501, 0
        %v1534 = vsel %vm703, %v1503, 0
        %v1536 = vsel %vm703, %v1505, 0
        %v1538 = vsel %vm703, %v1507, 0
        %v1540 = vsel %vm703, %v1509, 0
        %v1542 = vsel %vm703, %v1511, 0
        %v1544 = vsel %vm703, %v1513, 0
        %v1546 = vsel %vm703, %v1515, 0
        %v1548 = vsel %vm703, %v1517, 0
        %v1550 = vsel %vm703, %v1519, 0
        %v1552 = vsel %vm703, %v1521, 0
        %v1554 = vsel %vm703, %v1523, 0
        %1556 = vmatprep.subr.mxu0 0.0
        %1557 = vmatpush1.xpose.msra.mxu0 0.0
        %1558 = vmatprep.subr.mxu0 0.0
        %1559 = vmatpush1.xpose.msra.mxu0 0.0
        %1560 = vmatprep.subr.mxu0 0.0
        %1561 = vmatpush1.xpose.msra.mxu0 0.0
        %1562 = vmatprep.subr.mxu0 0.0
        %1563 = vmatpush1.xpose.msra.mxu0 0.0
        %1564 = vmatprep.subr.mxu0 0.0
        %1565 = vmatpush1.xpose.msra.mxu0 0.0
        %1566 = vmatprep.subr.mxu0 0.0
        %1567 = vmatpush1.xpose.msra.mxu0 0.0
        %1568 = vmatprep.subr.mxu0 0.0
        %1569 = vmatpush1.xpose.msra.mxu0 0.0
        %1570 = vmatprep.subr.mxu0 0.0
        %1571 = vmatpush1.xpose.msra.mxu0 0.0
        %1572 = vmatprep.subr.mxu0 0.0
        %1573 = vmatpush1.xpose.msra.mxu0 %v1554
        %1574 = vmatprep.subr.mxu0 0.0
        %1575 = vmatpush1.xpose.msra.mxu0 %v1552
        %1576 = vmatprep.subr.mxu0 0.0
        %1577 = vmatpush1.xpose.msra.mxu0 %v1550
        %1578 = vmatprep.subr.mxu0 0.0
        %1579 = vmatpush1.xpose.msra.mxu0 %v1548
        %1580 = vmatprep.subr.mxu0 0.0
        %1581 = vmatpush1.xpose.msra.mxu0 %v1546
        %1582 = vmatprep.subr.mxu0 0.0
        %1583 = vmatpush1.xpose.msra.mxu0 %v1544
        %1584 = vmatprep.subr.mxu0 0.0
        %1585 = vmatpush1.xpose.msra.mxu0 %v1542
        %1586 = vmatprep.subr.mxu0 0.0
        %1587 = vmatpush1.xpose.msra.mxu0 %v1540
        %1588 = vmatprep.subr.mxu0 0.0
        %1589 = vmatpush2.xpose.msra.mxu0 0.0
        %1590 = vmatprep.subr.mxu0 0.0
        %1591 = vmatpush2.xpose.msra.mxu0 0.0
        %1592 = vmatprep.subr.mxu0 0.0
        %1593 = vmatpush2.xpose.msra.mxu0 0.0
        %1594 = vmatprep.subr.mxu0 0.0
        %1595 = vmatpush2.xpose.msra.mxu0 0.0
        %1596 = vmatprep.subr.mxu0 0.0
        %1597 = vmatpush2.xpose.msra.mxu0 0.0
        %1598 = vmatprep.subr.mxu0 0.0
        %1599 = vmatpush2.xpose.msra.mxu0 0.0
        %1600 = vmatprep.subr.mxu0 0.0
        %1601 = vmatpush2.xpose.msra.mxu0 0.0
        %1602 = vmatprep.subr.mxu0 0.0
        %1603 = vmatpush2.xpose.msra.mxu0 0.0
        %1604 = vmatprep.subr.mxu0 0.0
        %1605 = vmatpush2.xpose.msra.mxu0 0.0
        %1606 = vmatprep.subr.mxu0 0.0
        %1607 = vmatpush2.xpose.msra.mxu0 0.0
        %1608 = vmatprep.subr.mxu0 0.0
        %1609 = vmatpush2.xpose.msra.mxu0 0.0
        %1610 = vmatprep.subr.mxu0 0.0
        %1611 = vmatpush2.xpose.msra.mxu0 0.0
        %1612 = vmatprep.subr.mxu0 0.0
        %1613 = vmatpush2.xpose.msra.mxu0 0.0
        %1614 = vmatprep.subr.mxu0 0.0
        %1615 = vmatpush2.xpose.msra.mxu0 0.0
        %1616 = vmatprep.subr.mxu0 0.0
        %1617 = vmatpush2.xpose.msra.mxu0 0.0
        %1618 = vmatprep.subr.mxu0 0.0
        %1619 = vmatpush2.xpose.msra.mxu0 0.0
        %1620 = vmatprep.mubr.f32.mxu0 0.0
        %1621 = vmatmul.mubr.f32.gmra.mxu0 %v1524
        %v1622 = vpop.f32.mrf.mxu0
        %v1623 = vadd.f32 0.0, %v1622
        %v1624 = vpop.f32.mrf.mxu0
        %1625 = vmatprep.mubr.f32.mxu0 0.0
        %1626 = vmatmul.mubr.f32.gmra.mxu0 %v1526
        %v1627 = vpop.f32.mrf.mxu0
        %v1628 = vadd.f32 0.0, %v1627
        %v1629 = vpop.f32.mrf.mxu0
        %1630 = vmatprep.mubr.f32.mxu0 0.0
        %1631 = vmatmul.mubr.f32.gmra.mxu0 %v1528
        %v1632 = vpop.f32.mrf.mxu0
        %v1633 = vadd.f32 0.0, %v1632
        %v1634 = vpop.f32.mrf.mxu0
        %1635 = vmatprep.mubr.f32.mxu0 0.0
        %1636 = vmatmul.mubr.f32.gmra.mxu0 %v1530
        %v1637 = vpop.f32.mrf.mxu0
        %v1638 = vadd.f32 0.0, %v1637
        %v1639 = vpop.f32.mrf.mxu0
        %1640 = vmatprep.mubr.f32.mxu0 0.0
        %1641 = vmatmul.mubr.f32.gmra.mxu0 %v1532
        %v1642 = vpop.f32.mrf.mxu0
        %v1643 = vadd.f32 0.0, %v1642
        %v1644 = vpop.f32.mrf.mxu0
        %1645 = vmatprep.mubr.f32.mxu0 0.0
        %1646 = vmatmul.mubr.f32.gmra.mxu0 %v1534
        %v1647 = vpop.f32.mrf.mxu0
        %v1648 = vadd.f32 0.0, %v1647
        %v1649 = vpop.f32.mrf.mxu0
        %1650 = vmatprep.mubr.f32.mxu0 0.0
        %1651 = vmatmul.mubr.f32.gmra.mxu0 %v1536
        %v1652 = vpop.f32.mrf.mxu0
        %v1653 = vadd.f32 0.0, %v1652
        %v1654 = vpop.f32.mrf.mxu0
        %1655 = vmatprep.mubr.f32.mxu0 0.0
        %1656 = vmatmul.mubr.f32.gmra.mxu0 %v1538
        %v1657 = vpop.f32.mrf.mxu0
        %v1658 = vadd.f32 0.0, %v1657
        %v1659 = vpop.f32.mrf.mxu0
        %1660 = vdwg.mxu0
        %v1661 = vmul.f32 %v1623, 0.25
        %v1662 = vmul.f32 %v1628, 0.25
        %v1663 = vmul.f32 %v1633, 0.25
        %v1664 = vmul.f32 %v1638, 0.25
        %v1665 = vmul.f32 %v1643, 0.25
        %v1666 = vmul.f32 %v1648, 0.25
        %v1667 = vmul.f32 %v1653, 0.25
        %v1668 = vmul.f32 %v1658, 0.25
        %v1669 = vsel %vm593, %v1661, -inf
        %1670 = vmax.xlane.f32.xlu0 %v1669
        %v1671 = vpop.xlane.xlu0 %1670
        %v1672 = vsel %vm593, %v1662, -inf
        %1673 = vmax.xlane.f32.xlu0 %v1672
        %v1674 = vpop.xlane.xlu0 %1673
        %v1675 = vsel %vm593, %v1663, -inf
        %1676 = vmax.xlane.f32.xlu0 %v1675
        %v1677 = vpop.xlane.xlu0 %1676
        %v1678 = vsel %vm593, %v1664, -inf
        %1679 = vmax.xlane.f32.xlu0 %v1678
        %v1680 = vpop.xlane.xlu0 %1679
        %v1681 = vsel %vm593, %v1665, -inf
        %1682 = vmax.xlane.f32.xlu0 %v1681
        %v1683 = vpop.xlane.xlu0 %1682
        %v1684 = vsel %vm593, %v1666, -inf
        %1685 = vmax.xlane.f32.xlu0 %v1684
        %v1686 = vpop.xlane.xlu0 %1685
        %v1687 = vsel %vm593, %v1667, -inf
        %1688 = vmax.xlane.f32.xlu0 %v1687
        %v1689 = vpop.xlane.xlu0 %1688
        %v1690 = vsel %vm593, %v1668, -inf
        %1691 = vmax.xlane.f32.xlu0 %v1690
        %v1692 = vpop.xlane.xlu0 %1691
        %v1693 = vsub.f32 %v1661, %v1671
        %v1694 = vsub.f32 %v1662, %v1674
        %v1695 = vsub.f32 %v1663, %v1677
        %v1696 = vsub.f32 %v1664, %v1680
        %v1697 = vsub.f32 %v1665, %v1683
        %v1698 = vsub.f32 %v1666, %v1686
        %v1699 = vsub.f32 %v1667, %v1689
        %v1700 = vsub.f32 %v1668, %v1692
        %v1701 = vmul.f32 %v1693, 1.442695
        %v1702 = vpow.pop %v1701
        %v1703 = vmul.f32 %v1694, 1.442695
        %v1704 = vpow.pop %v1703
        %v1705 = vmul.f32 %v1695, 1.442695
        %v1706 = vpow.pop %v1705
        %v1707 = vmul.f32 %v1696, 1.442695
        %v1708 = vpow.pop %v1707
        %v1709 = vmul.f32 %v1697, 1.442695
        %v1710 = vpow.pop %v1709
        %v1711 = vmul.f32 %v1698, 1.442695
        %v1712 = vpow.pop %v1711
        %v1713 = vmul.f32 %v1699, 1.442695
        %v1714 = vpow.pop %v1713
        %v1715 = vmul.f32 %v1700, 1.442695
        %v1716 = vpow.pop %v1715
        %v1717 = vsel %vm593, %v1702, 0.0
        %1718 = vadd.xlane.f32.xlu0 %v1717
        %v1719 = vpop.xlane.xlu0 %1718
        %v1720 = vsel %vm593, %v1704, 0.0
        %1721 = vadd.xlane.f32.xlu0 %v1720
        %v1722 = vpop.xlane.xlu0 %1721
        %v1723 = vsel %vm593, %v1706, 0.0
        %1724 = vadd.xlane.f32.xlu0 %v1723
        %v1725 = vpop.xlane.xlu0 %1724
        %v1726 = vsel %vm593, %v1708, 0.0
        %1727 = vadd.xlane.f32.xlu0 %v1726
        %v1728 = vpop.xlane.xlu0 %1727
        %v1729 = vsel %vm593, %v1710, 0.0
        %1730 = vadd.xlane.f32.xlu0 %v1729
        %v1731 = vpop.xlane.xlu0 %1730
        %v1732 = vsel %vm593, %v1712, 0.0
        %1733 = vadd.xlane.f32.xlu0 %v1732
        %v1734 = vpop.xlane.xlu0 %1733
        %v1735 = vsel %vm593, %v1714, 0.0
        %1736 = vadd.xlane.f32.xlu0 %v1735
        %v1737 = vpop.xlane.xlu0 %1736
        %v1738 = vsel %vm593, %v1716, 0.0
        %1739 = vadd.xlane.f32.xlu0 %v1738
        %v1740 = vpop.xlane.xlu0 %1739
        %v1741 = vrcp.pop %v1719
        %v1742 = vrcp.pop %v1722
        %v1743 = vrcp.pop %v1725
        %v1744 = vrcp.pop %v1728
        %v1745 = vrcp.pop %v1731
        %v1746 = vrcp.pop %v1734
        %v1747 = vrcp.pop %v1737
        %v1748 = vrcp.pop %v1740
        %v1749 = vmul.f32 %v1702, %v1741
        %v1750 = vmul.f32 %v1704, %v1742
        %v1751 = vmul.f32 %v1706, %v1743
        %v1752 = vmul.f32 %v1708, %v1744
        %v1753 = vmul.f32 %v1710, %v1745
        %v1754 = vmul.f32 %v1712, %v1746
        %v1755 = vmul.f32 %v1714, %v1747
        %v1756 = vmul.f32 %v1716, %v1748
        %1757 = vrot.lane.b32.xlu0 %v643, 96
        %v1758 = vpop.permute.xlu0 %1757
        %1759 = vrot.lane.b32.xlu0 %v647, 96
        %v1760 = vpop.permute.xlu0 %1759
        %1761 = vrot.lane.b32.xlu0 %v653, 96
        %v1762 = vpop.permute.xlu0 %1761
        %1763 = vrot.lane.b32.xlu0 %v657, 96
        %v1764 = vpop.permute.xlu0 %1763
        %1765 = vrot.lane.b32.xlu0 %v663, 96
        %v1766 = vpop.permute.xlu0 %1765
        %1767 = vrot.lane.b32.xlu0 %v667, 96
        %v1768 = vpop.permute.xlu0 %1767
        %1769 = vrot.lane.b32.xlu0 %v673, 96
        %v1770 = vpop.permute.xlu0 %1769
        %1771 = vrot.lane.b32.xlu0 %v677, 96
        %v1772 = vpop.permute.xlu0 %1771
        %v1782 = vsel %vm593, %v1749, 0
        %v1785 = vsel %vm593, %v1750, 0
        %v1788 = vsel %vm593, %v1751, 0
        %v1791 = vsel %vm593, %v1752, 0
        %v1794 = vsel %vm593, %v1753, 0
        %v1797 = vsel %vm593, %v1754, 0
        %v1800 = vsel %vm593, %v1755, 0
        %v1803 = vsel %vm593, %v1756, 0
        %1805 = vmatprep.subr.mxu0 0.0
        %1806 = vmatpush1.msra.mxu0 0.0
        %1807 = vmatprep.subr.mxu0 0.0
        %1808 = vmatpush1.msra.mxu0 0.0
        %1809 = vmatprep.subr.mxu0 0.0
        %1810 = vmatpush1.msra.mxu0 0.0
        %1811 = vmatprep.subr.mxu0 0.0
        %1812 = vmatpush1.msra.mxu0 0.0
        %1813 = vmatprep.subr.mxu0 0.0
        %1814 = vmatpush1.msra.mxu0 0.0
        %1815 = vmatprep.subr.mxu0 0.0
        %1816 = vmatpush1.msra.mxu0 0.0
        %1817 = vmatprep.subr.mxu0 0.0
        %1818 = vmatpush1.msra.mxu0 0.0
        %1819 = vmatprep.subr.mxu0 0.0
        %1820 = vmatpush1.msra.mxu0 0.0
        %1821 = vmatprep.subr.mxu0 0.0
        %1822 = vmatpush1.msra.mxu0 %v1772
        %1823 = vmatprep.subr.mxu0 0.0
        %1824 = vmatpush1.msra.mxu0 %v1770
        %1825 = vmatprep.subr.mxu0 0.0
        %1826 = vmatpush1.msra.mxu0 %v1768
        %1827 = vmatprep.subr.mxu0 0.0
        %1828 = vmatpush1.msra.mxu0 %v1766
        %1829 = vmatprep.subr.mxu0 0.0
        %1830 = vmatpush1.msra.mxu0 %v1764
        %1831 = vmatprep.subr.mxu0 0.0
        %1832 = vmatpush1.msra.mxu0 %v1762
        %1833 = vmatprep.subr.mxu0 0.0
        %1834 = vmatpush1.msra.mxu0 %v1760
        %1835 = vmatprep.subr.mxu0 0.0
        %1836 = vmatpush1.msra.mxu0 %v1758
        %1837 = vmatprep.subr.mxu0 0.0
        %1838 = vmatpush2.msra.mxu0 0.0
        %1839 = vmatprep.subr.mxu0 0.0
        %1840 = vmatpush2.msra.mxu0 0.0
        %1841 = vmatprep.subr.mxu0 0.0
        %1842 = vmatpush2.msra.mxu0 0.0
        %1843 = vmatprep.subr.mxu0 0.0
        %1844 = vmatpush2.msra.mxu0 0.0
        %1845 = vmatprep.subr.mxu0 0.0
        %1846 = vmatpush2.msra.mxu0 0.0
        %1847 = vmatprep.subr.mxu0 0.0
        %1848 = vmatpush2.msra.mxu0 0.0
        %1849 = vmatprep.subr.mxu0 0.0
        %1850 = vmatpush2.msra.mxu0 0.0
        %1851 = vmatprep.subr.mxu0 0.0
        %1852 = vmatpush2.msra.mxu0 0.0
        %1853 = vmatprep.subr.mxu0 0.0
        %1854 = vmatpush2.msra.mxu0 0.0
        %1855 = vmatprep.subr.mxu0 0.0
        %1856 = vmatpush2.msra.mxu0 0.0
        %1857 = vmatprep.subr.mxu0 0.0
        %1858 = vmatpush2.msra.mxu0 0.0
        %1859 = vmatprep.subr.mxu0 0.0
        %1860 = vmatpush2.msra.mxu0 0.0
        %1861 = vmatprep.subr.mxu0 0.0
        %1862 = vmatpush2.msra.mxu0 0.0
        %1863 = vmatprep.subr.mxu0 0.0
        %1864 = vmatpush2.msra.mxu0 0.0
        %1865 = vmatprep.subr.mxu0 0.0
        %1866 = vmatpush2.msra.mxu0 0.0
        %1867 = vmatprep.subr.mxu0 0.0
        %1868 = vmatpush2.msra.mxu0 0.0
        %1869 = vmatprep.mubr.f32.mxu0 0.0
        %1870 = vmatmul.mubr.f32.gmra.mxu0 %v1782
        %v1871 = vpop.f32.mrf.mxu0
        %v1872 = vadd.f32 0.0, %v1871
        %v1873 = vpop.f32.mrf.mxu0
        %1874 = vmatprep.mubr.f32.mxu0 0.0
        %1875 = vmatmul.mubr.f32.gmra.mxu0 %v1785
        %v1876 = vpop.f32.mrf.mxu0
        %v1877 = vadd.f32 0.0, %v1876
        %v1878 = vpop.f32.mrf.mxu0
        %1879 = vmatprep.mubr.f32.mxu0 0.0
        %1880 = vmatmul.mubr.f32.gmra.mxu0 %v1788
        %v1881 = vpop.f32.mrf.mxu0
        %v1882 = vadd.f32 0.0, %v1881
        %v1883 = vpop.f32.mrf.mxu0
        %1884 = vmatprep.mubr.f32.mxu0 0.0
        %1885 = vmatmul.mubr.f32.gmra.mxu0 %v1791
        %v1886 = vpop.f32.mrf.mxu0
        %v1887 = vadd.f32 0.0, %v1886
        %v1888 = vpop.f32.mrf.mxu0
        %1889 = vmatprep.mubr.f32.mxu0 0.0
        %1890 = vmatmul.mubr.f32.gmra.mxu0 %v1794
        %v1891 = vpop.f32.mrf.mxu0
        %v1892 = vadd.f32 0.0, %v1891
        %v1893 = vpop.f32.mrf.mxu0
        %1894 = vmatprep.mubr.f32.mxu0 0.0
        %1895 = vmatmul.mubr.f32.gmra.mxu0 %v1797
        %v1896 = vpop.f32.mrf.mxu0
        %v1897 = vadd.f32 0.0, %v1896
        %v1898 = vpop.f32.mrf.mxu0
        %1899 = vmatprep.mubr.f32.mxu0 0.0
        %1900 = vmatmul.mubr.f32.gmra.mxu0 %v1800
        %v1901 = vpop.f32.mrf.mxu0
        %v1902 = vadd.f32 0.0, %v1901
        %v1903 = vpop.f32.mrf.mxu0
        %1904 = vmatprep.mubr.f32.mxu0 0.0
        %1905 = vmatmul.mubr.f32.gmra.mxu0 %v1803
        %v1906 = vpop.f32.mrf.mxu0
        %v1907 = vadd.f32 0.0, %v1906
        %v1908 = vpop.f32.mrf.mxu0
        %1909 = vdwg.mxu0
        %1910 = vrot.lane.b32.xlu0 %v641, 80
        %v1911 = vpop.permute.xlu0 %1910
        %1912 = vrot.lane.b32.xlu0 %v645, 80
        %v1913 = vpop.permute.xlu0 %1912
        %1914 = vrot.lane.b32.xlu0 %v651, 80
        %v1915 = vpop.permute.xlu0 %1914
        %1916 = vrot.lane.b32.xlu0 %v655, 80
        %v1917 = vpop.permute.xlu0 %1916
        %1918 = vrot.lane.b32.xlu0 %v661, 80
        %v1919 = vpop.permute.xlu0 %1918
        %1920 = vrot.lane.b32.xlu0 %v665, 80
        %v1921 = vpop.permute.xlu0 %1920
        %1922 = vrot.lane.b32.xlu0 %v671, 80
        %v1923 = vpop.permute.xlu0 %1922
        %1924 = vrot.lane.b32.xlu0 %v675, 80
        %v1925 = vpop.permute.xlu0 %1924
        %1926 = vrot.lane.b32.xlu0 %v641, 16
        %v1927 = vpop.permute.xlu0 %1926
        %1928 = vrot.lane.b32.xlu0 %v645, 16
        %v1929 = vpop.permute.xlu0 %1928
        %1930 = vrot.lane.b32.xlu0 %v651, 16
        %v1931 = vpop.permute.xlu0 %1930
        %1932 = vrot.lane.b32.xlu0 %v655, 16
        %v1933 = vpop.permute.xlu0 %1932
        %1934 = vrot.lane.b32.xlu0 %v661, 16
        %v1935 = vpop.permute.xlu0 %1934
        %1936 = vrot.lane.b32.xlu0 %v665, 16
        %v1937 = vpop.permute.xlu0 %1936
        %1938 = vrot.lane.b32.xlu0 %v671, 16
        %v1939 = vpop.permute.xlu0 %1938
        %1940 = vrot.lane.b32.xlu0 %v675, 16
        %v1941 = vpop.permute.xlu0 %1940
        %v1942 = vsel %vm703, %v1911, 0
        %v1944 = vsel %vm703, %v1913, 0
        %v1946 = vsel %vm703, %v1915, 0
        %v1948 = vsel %vm703, %v1917, 0
        %v1950 = vsel %vm703, %v1919, 0
        %v1952 = vsel %vm703, %v1921, 0
        %v1954 = vsel %vm703, %v1923, 0
        %v1956 = vsel %vm703, %v1925, 0
        %v1958 = vsel %vm703, %v1927, 0
        %v1960 = vsel %vm703, %v1929, 0
        %v1962 = vsel %vm703, %v1931, 0
        %v1964 = vsel %vm703, %v1933, 0
        %v1966 = vsel %vm703, %v1935, 0
        %v1968 = vsel %vm703, %v1937, 0
        %v1970 = vsel %vm703, %v1939, 0
        %v1972 = vsel %vm703, %v1941, 0
        %1974 = vmatprep.subr.mxu0 0.0
        %1975 = vmatpush1.xpose.msra.mxu0 0.0
        %1976 = vmatprep.subr.mxu0 0.0
        %1977 = vmatpush1.xpose.msra.mxu0 0.0
        %1978 = vmatprep.subr.mxu0 0.0
        %1979 = vmatpush1.xpose.msra.mxu0 0.0
        %1980 = vmatprep.subr.mxu0 0.0
        %1981 = vmatpush1.xpose.msra.mxu0 0.0
        %1982 = vmatprep.subr.mxu0 0.0
        %1983 = vmatpush1.xpose.msra.mxu0 0.0
        %1984 = vmatprep.subr.mxu0 0.0
        %1985 = vmatpush1.xpose.msra.mxu0 0.0
        %1986 = vmatprep.subr.mxu0 0.0
        %1987 = vmatpush1.xpose.msra.mxu0 0.0
        %1988 = vmatprep.subr.mxu0 0.0
        %1989 = vmatpush1.xpose.msra.mxu0 0.0
        %1990 = vmatprep.subr.mxu0 0.0
        %1991 = vmatpush1.xpose.msra.mxu0 %v1972
        %1992 = vmatprep.subr.mxu0 0.0
        %1993 = vmatpush1.xpose.msra.mxu0 %v1970
        %1994 = vmatprep.subr.mxu0 0.0
        %1995 = vmatpush1.xpose.msra.mxu0 %v1968
        %1996 = vmatprep.subr.mxu0 0.0
        %1997 = vmatpush1.xpose.msra.mxu0 %v1966
        %1998 = vmatprep.subr.mxu0 0.0
        %1999 = vmatpush1.xpose.msra.mxu0 %v1964
        %2000 = vmatprep.subr.mxu0 0.0
        %2001 = vmatpush1.xpose.msra.mxu0 %v1962
        %2002 = vmatprep.subr.mxu0 0.0
        %2003 = vmatpush1.xpose.msra.mxu0 %v1960
        %2004 = vmatprep.subr.mxu0 0.0
        %2005 = vmatpush1.xpose.msra.mxu0 %v1958
        %2006 = vmatprep.subr.mxu0 0.0
        %2007 = vmatpush2.xpose.msra.mxu0 0.0
        %2008 = vmatprep.subr.mxu0 0.0
        %2009 = vmatpush2.xpose.msra.mxu0 0.0
        %2010 = vmatprep.subr.mxu0 0.0
        %2011 = vmatpush2.xpose.msra.mxu0 0.0
        %2012 = vmatprep.subr.mxu0 0.0
        %2013 = vmatpush2.xpose.msra.mxu0 0.0
        %2014 = vmatprep.subr.mxu0 0.0
        %2015 = vmatpush2.xpose.msra.mxu0 0.0
        %2016 = vmatprep.subr.mxu0 0.0
        %2017 = vmatpush2.xpose.msra.mxu0 0.0
        %2018 = vmatprep.subr.mxu0 0.0
        %2019 = vmatpush2.xpose.msra.mxu0 0.0
        %2020 = vmatprep.subr.mxu0 0.0
        %2021 = vmatpush2.xpose.msra.mxu0 0.0
        %2022 = vmatprep.subr.mxu0 0.0
        %2023 = vmatpush2.xpose.msra.mxu0 0.0
        %2024 = vmatprep.subr.mxu0 0.0
        %2025 = vmatpush2.xpose.msra.mxu0 0.0
        %2026 = vmatprep.subr.mxu0 0.0
        %2027 = vmatpush2.xpose.msra.mxu0 0.0
        %2028 = vmatprep.subr.mxu0 0.0
        %2029 = vmatpush2.xpose.msra.mxu0 0.0
        %2030 = vmatprep.subr.mxu0 0.0
        %2031 = vmatpush2.xpose.msra.mxu0 0.0
        %2032 = vmatprep.subr.mxu0 0.0
        %2033 = vmatpush2.xpose.msra.mxu0 0.0
        %2034 = vmatprep.subr.mxu0 0.0
        %2035 = vmatpush2.xpose.msra.mxu0 0.0
        %2036 = vmatprep.subr.mxu0 0.0
        %2037 = vmatpush2.xpose.msra.mxu0 0.0
        %2038 = vmatprep.mubr.f32.mxu0 0.0
        %2039 = vmatmul.mubr.f32.gmra.mxu0 %v1942
        %v2040 = vpop.f32.mrf.mxu0
        %v2041 = vadd.f32 0.0, %v2040
        %v2042 = vpop.f32.mrf.mxu0
        %2043 = vmatprep.mubr.f32.mxu0 0.0
        %2044 = vmatmul.mubr.f32.gmra.mxu0 %v1944
        %v2045 = vpop.f32.mrf.mxu0
        %v2046 = vadd.f32 0.0, %v2045
        %v2047 = vpop.f32.mrf.mxu0
        %2048 = vmatprep.mubr.f32.mxu0 0.0
        %2049 = vmatmul.mubr.f32.gmra.mxu0 %v1946
        %v2050 = vpop.f32.mrf.mxu0
        %v2051 = vadd.f32 0.0, %v2050
        %v2052 = vpop.f32.mrf.mxu0
        %2053 = vmatprep.mubr.f32.mxu0 0.0
        %2054 = vmatmul.mubr.f32.gmra.mxu0 %v1948
        %v2055 = vpop.f32.mrf.mxu0
        %v2056 = vadd.f32 0.0, %v2055
        %v2057 = vpop.f32.mrf.mxu0
        %2058 = vmatprep.mubr.f32.mxu0 0.0
        %2059 = vmatmul.mubr.f32.gmra.mxu0 %v1950
        %v2060 = vpop.f32.mrf.mxu0
        %v2061 = vadd.f32 0.0, %v2060
        %v2062 = vpop.f32.mrf.mxu0
        %2063 = vmatprep.mubr.f32.mxu0 0.0
        %2064 = vmatmul.mubr.f32.gmra.mxu0 %v1952
        %v2065 = vpop.f32.mrf.mxu0
        %v2066 = vadd.f32 0.0, %v2065
        %v2067 = vpop.f32.mrf.mxu0
        %2068 = vmatprep.mubr.f32.mxu0 0.0
        %2069 = vmatmul.mubr.f32.gmra.mxu0 %v1954
        %v2070 = vpop.f32.mrf.mxu0
        %v2071 = vadd.f32 0.0, %v2070
        %v2072 = vpop.f32.mrf.mxu0
        %2073 = vmatprep.mubr.f32.mxu0 0.0
        %2074 = vmatmul.mubr.f32.gmra.mxu0 %v1956
        %v2075 = vpop.f32.mrf.mxu0
        %v2076 = vadd.f32 0.0, %v2075
        %v2077 = vpop.f32.mrf.mxu0
        %2078 = vdwg.mxu0
        %v2079 = vmul.f32 %v2041, 0.25
        %v2080 = vmul.f32 %v2046, 0.25
        %v2081 = vmul.f32 %v2051, 0.25
        %v2082 = vmul.f32 %v2056, 0.25
        %v2083 = vmul.f32 %v2061, 0.25
        %v2084 = vmul.f32 %v2066, 0.25
        %v2085 = vmul.f32 %v2071, 0.25
        %v2086 = vmul.f32 %v2076, 0.25
        %v2087 = vsel %vm593, %v2079, -inf
        %2088 = vmax.xlane.f32.xlu0 %v2087
        %v2089 = vpop.xlane.xlu0 %2088
        %v2090 = vsel %vm593, %v2080, -inf
        %2091 = vmax.xlane.f32.xlu0 %v2090
        %v2092 = vpop.xlane.xlu0 %2091
        %v2093 = vsel %vm593, %v2081, -inf
        %2094 = vmax.xlane.f32.xlu0 %v2093
        %v2095 = vpop.xlane.xlu0 %2094
        %v2096 = vsel %vm593, %v2082, -inf
        %2097 = vmax.xlane.f32.xlu0 %v2096
        %v2098 = vpop.xlane.xlu0 %2097
        %v2099 = vsel %vm593, %v2083, -inf
        %2100 = vmax.xlane.f32.xlu0 %v2099
        %v2101 = vpop.xlane.xlu0 %2100
        %v2102 = vsel %vm593, %v2084, -inf
        %2103 = vmax.xlane.f32.xlu0 %v2102
        %v2104 = vpop.xlane.xlu0 %2103
        %v2105 = vsel %vm593, %v2085, -inf
        %2106 = vmax.xlane.f32.xlu0 %v2105
        %v2107 = vpop.xlane.xlu0 %2106
        %v2108 = vsel %vm593, %v2086, -inf
        %2109 = vmax.xlane.f32.xlu0 %v2108
        %v2110 = vpop.xlane.xlu0 %2109
        %v2111 = vsub.f32 %v2079, %v2089
        %v2112 = vsub.f32 %v2080, %v2092
        %v2113 = vsub.f32 %v2081, %v2095
        %v2114 = vsub.f32 %v2082, %v2098
        %v2115 = vsub.f32 %v2083, %v2101
        %v2116 = vsub.f32 %v2084, %v2104
        %v2117 = vsub.f32 %v2085, %v2107
        %v2118 = vsub.f32 %v2086, %v2110
        %v2119 = vmul.f32 %v2111, 1.442695
        %v2120 = vpow.pop %v2119
        %v2121 = vmul.f32 %v2112, 1.442695
        %v2122 = vpow.pop %v2121
        %v2123 = vmul.f32 %v2113, 1.442695
        %v2124 = vpow.pop %v2123
        %v2125 = vmul.f32 %v2114, 1.442695
        %v2126 = vpow.pop %v2125
        %v2127 = vmul.f32 %v2115, 1.442695
        %v2128 = vpow.pop %v2127
        %v2129 = vmul.f32 %v2116, 1.442695
        %v2130 = vpow.pop %v2129
        %v2131 = vmul.f32 %v2117, 1.442695
        %v2132 = vpow.pop %v2131
        %v2133 = vmul.f32 %v2118, 1.442695
        %v2134 = vpow.pop %v2133
        %v2135 = vsel %vm593, %v2120, 0.0
        %2136 = vadd.xlane.f32.xlu0 %v2135
        %v2137 = vpop.xlane.xlu0 %2136
        %v2138 = vsel %vm593, %v2122, 0.0
        %2139 = vadd.xlane.f32.xlu0 %v2138
        %v2140 = vpop.xlane.xlu0 %2139
        %v2141 = vsel %vm593, %v2124, 0.0
        %2142 = vadd.xlane.f32.xlu0 %v2141
        %v2143 = vpop.xlane.xlu0 %2142
        %v2144 = vsel %vm593, %v2126, 0.0
        %2145 = vadd.xlane.f32.xlu0 %v2144
        %v2146 = vpop.xlane.xlu0 %2145
        %v2147 = vsel %vm593, %v2128, 0.0
        %2148 = vadd.xlane.f32.xlu0 %v2147
        %v2149 = vpop.xlane.xlu0 %2148
        %v2150 = vsel %vm593, %v2130, 0.0
        %2151 = vadd.xlane.f32.xlu0 %v2150
        %v2152 = vpop.xlane.xlu0 %2151
        %v2153 = vsel %vm593, %v2132, 0.0
        %2154 = vadd.xlane.f32.xlu0 %v2153
        %v2155 = vpop.xlane.xlu0 %2154
        %v2156 = vsel %vm593, %v2134, 0.0
        %2157 = vadd.xlane.f32.xlu0 %v2156
        %v2158 = vpop.xlane.xlu0 %2157
        %v2159 = vrcp.pop %v2137
        %v2160 = vrcp.pop %v2140
        %v2161 = vrcp.pop %v2143
        %v2162 = vrcp.pop %v2146
        %v2163 = vrcp.pop %v2149
        %v2164 = vrcp.pop %v2152
        %v2165 = vrcp.pop %v2155
        %v2166 = vrcp.pop %v2158
        %v2167 = vmul.f32 %v2120, %v2159
        %v2168 = vmul.f32 %v2122, %v2160
        %v2169 = vmul.f32 %v2124, %v2161
        %v2170 = vmul.f32 %v2126, %v2162
        %v2171 = vmul.f32 %v2128, %v2163
        %v2172 = vmul.f32 %v2130, %v2164
        %v2173 = vmul.f32 %v2132, %v2165
        %v2174 = vmul.f32 %v2134, %v2166
        %2175 = vrot.lane.b32.xlu0 %v643, 80
        %v2176 = vpop.permute.xlu0 %2175
        %2177 = vrot.lane.b32.xlu0 %v647, 80
        %v2178 = vpop.permute.xlu0 %2177
        %2179 = vrot.lane.b32.xlu0 %v653, 80
        %v2180 = vpop.permute.xlu0 %2179
        %2181 = vrot.lane.b32.xlu0 %v657, 80
        %v2182 = vpop.permute.xlu0 %2181
        %2183 = vrot.lane.b32.xlu0 %v663, 80
        %v2184 = vpop.permute.xlu0 %2183
        %2185 = vrot.lane.b32.xlu0 %v667, 80
        %v2186 = vpop.permute.xlu0 %2185
        %2187 = vrot.lane.b32.xlu0 %v673, 80
        %v2188 = vpop.permute.xlu0 %2187
        %2189 = vrot.lane.b32.xlu0 %v677, 80
        %v2190 = vpop.permute.xlu0 %2189
        %v2200 = vsel %vm593, %v2167, 0
        %v2203 = vsel %vm593, %v2168, 0
        %v2206 = vsel %vm593, %v2169, 0
        %v2209 = vsel %vm593, %v2170, 0
        %v2212 = vsel %vm593, %v2171, 0
        %v2215 = vsel %vm593, %v2172, 0
        %v2218 = vsel %vm593, %v2173, 0
        %v2221 = vsel %vm593, %v2174, 0
        %2223 = vmatprep.subr.mxu0 0.0
        %2224 = vmatpush1.msra.mxu0 0.0
        %2225 = vmatprep.subr.mxu0 0.0
        %2226 = vmatpush1.msra.mxu0 0.0
        %2227 = vmatprep.subr.mxu0 0.0
        %2228 = vmatpush1.msra.mxu0 0.0
        %2229 = vmatprep.subr.mxu0 0.0
        %2230 = vmatpush1.msra.mxu0 0.0
        %2231 = vmatprep.subr.mxu0 0.0
        %2232 = vmatpush1.msra.mxu0 0.0
        %2233 = vmatprep.subr.mxu0 0.0
        %2234 = vmatpush1.msra.mxu0 0.0
        %2235 = vmatprep.subr.mxu0 0.0
        %2236 = vmatpush1.msra.mxu0 0.0
        %2237 = vmatprep.subr.mxu0 0.0
        %2238 = vmatpush1.msra.mxu0 0.0
        %2239 = vmatprep.subr.mxu0 0.0
        %2240 = vmatpush1.msra.mxu0 %v2190
        %2241 = vmatprep.subr.mxu0 0.0
        %2242 = vmatpush1.msra.mxu0 %v2188
        %2243 = vmatprep.subr.mxu0 0.0
        %2244 = vmatpush1.msra.mxu0 %v2186
        %2245 = vmatprep.subr.mxu0 0.0
        %2246 = vmatpush1.msra.mxu0 %v2184
        %2247 = vmatprep.subr.mxu0 0.0
        %2248 = vmatpush1.msra.mxu0 %v2182
        %2249 = vmatprep.subr.mxu0 0.0
        %2250 = vmatpush1.msra.mxu0 %v2180
        %2251 = vmatprep.subr.mxu0 0.0
        %2252 = vmatpush1.msra.mxu0 %v2178
        %2253 = vmatprep.subr.mxu0 0.0
        %2254 = vmatpush1.msra.mxu0 %v2176
        %2255 = vmatprep.subr.mxu0 0.0
        %2256 = vmatpush2.msra.mxu0 0.0
        %2257 = vmatprep.subr.mxu0 0.0
        %2258 = vmatpush2.msra.mxu0 0.0
        %2259 = vmatprep.subr.mxu0 0.0
        %2260 = vmatpush2.msra.mxu0 0.0
        %2261 = vmatprep.subr.mxu0 0.0
        %2262 = vmatpush2.msra.mxu0 0.0
        %2263 = vmatprep.subr.mxu0 0.0
        %2264 = vmatpush2.msra.mxu0 0.0
        %2265 = vmatprep.subr.mxu0 0.0
        %2266 = vmatpush2.msra.mxu0 0.0
        %2267 = vmatprep.subr.mxu0 0.0
        %2268 = vmatpush2.msra.mxu0 0.0
        %2269 = vmatprep.subr.mxu0 0.0
        %2270 = vmatpush2.msra.mxu0 0.0
        %2271 = vmatprep.subr.mxu0 0.0
        %2272 = vmatpush2.msra.mxu0 0.0
        %2273 = vmatprep.subr.mxu0 0.0
        %2274 = vmatpush2.msra.mxu0 0.0
        %2275 = vmatprep.subr.mxu0 0.0
        %2276 = vmatpush2.msra.mxu0 0.0
        %2277 = vmatprep.subr.mxu0 0.0
        %2278 = vmatpush2.msra.mxu0 0.0
        %2279 = vmatprep.subr.mxu0 0.0
        %2280 = vmatpush2.msra.mxu0 0.0
        %2281 = vmatprep.subr.mxu0 0.0
        %2282 = vmatpush2.msra.mxu0 0.0
        %2283 = vmatprep.subr.mxu0 0.0
        %2284 = vmatpush2.msra.mxu0 0.0
        %2285 = vmatprep.subr.mxu0 0.0
        %2286 = vmatpush2.msra.mxu0 0.0
        %2287 = vmatprep.mubr.f32.mxu0 0.0
        %2288 = vmatmul.mubr.f32.gmra.mxu0 %v2200
        %v2289 = vpop.f32.mrf.mxu0
        %v2290 = vadd.f32 0.0, %v2289
        %v2291 = vpop.f32.mrf.mxu0
        %2292 = vmatprep.mubr.f32.mxu0 0.0
        %2293 = vmatmul.mubr.f32.gmra.mxu0 %v2203
        %v2294 = vpop.f32.mrf.mxu0
        %v2295 = vadd.f32 0.0, %v2294
        %v2296 = vpop.f32.mrf.mxu0
        %2297 = vmatprep.mubr.f32.mxu0 0.0
        %2298 = vmatmul.mubr.f32.gmra.mxu0 %v2206
        %v2299 = vpop.f32.mrf.mxu0
        %v2300 = vadd.f32 0.0, %v2299
        %v2301 = vpop.f32.mrf.mxu0
        %2302 = vmatprep.mubr.f32.mxu0 0.0
        %2303 = vmatmul.mubr.f32.gmra.mxu0 %v2209
        %v2304 = vpop.f32.mrf.mxu0
        %v2305 = vadd.f32 0.0, %v2304
        %v2306 = vpop.f32.mrf.mxu0
        %2307 = vmatprep.mubr.f32.mxu0 0.0
        %2308 = vmatmul.mubr.f32.gmra.mxu0 %v2212
        %v2309 = vpop.f32.mrf.mxu0
        %v2310 = vadd.f32 0.0, %v2309
        %v2311 = vpop.f32.mrf.mxu0
        %2312 = vmatprep.mubr.f32.mxu0 0.0
        %2313 = vmatmul.mubr.f32.gmra.mxu0 %v2215
        %v2314 = vpop.f32.mrf.mxu0
        %v2315 = vadd.f32 0.0, %v2314
        %v2316 = vpop.f32.mrf.mxu0
        %2317 = vmatprep.mubr.f32.mxu0 0.0
        %2318 = vmatmul.mubr.f32.gmra.mxu0 %v2218
        %v2319 = vpop.f32.mrf.mxu0
        %v2320 = vadd.f32 0.0, %v2319
        %v2321 = vpop.f32.mrf.mxu0
        %2322 = vmatprep.mubr.f32.mxu0 0.0
        %2323 = vmatmul.mubr.f32.gmra.mxu0 %v2221
        %v2324 = vpop.f32.mrf.mxu0
        %v2325 = vadd.f32 0.0, %v2324
        %v2326 = vpop.f32.mrf.mxu0
        %2327 = vdwg.mxu0
        %2336 = vrot.lane.b32.xlu0 %v1454, 16
        %v2337 = vpop.permute.xlu0 %2336
        %2338 = vrot.lane.b32.xlu0 %v1459, 16
        %v2339 = vpop.permute.xlu0 %2338
        %2340 = vrot.lane.b32.xlu0 %v1464, 16
        %v2341 = vpop.permute.xlu0 %2340
        %2342 = vrot.lane.b32.xlu0 %v1469, 16
        %v2343 = vpop.permute.xlu0 %2342
        %2344 = vrot.lane.b32.xlu0 %v1474, 16
        %v2345 = vpop.permute.xlu0 %2344
        %2346 = vrot.lane.b32.xlu0 %v1479, 16
        %v2347 = vpop.permute.xlu0 %2346
        %2348 = vrot.lane.b32.xlu0 %v1484, 16
        %v2349 = vpop.permute.xlu0 %2348
        %2350 = vrot.lane.b32.xlu0 %v1489, 16
        %v2351 = vpop.permute.xlu0 %2350
        %2368 = vrot.lane.b32.xlu0 %v1872, 32
        %v2369 = vpop.permute.xlu0 %2368
        %2370 = vrot.lane.b32.xlu0 %v1877, 32
        %v2371 = vpop.permute.xlu0 %2370
        %2372 = vrot.lane.b32.xlu0 %v1882, 32
        %v2373 = vpop.permute.xlu0 %2372
        %2374 = vrot.lane.b32.xlu0 %v1887, 32
        %v2375 = vpop.permute.xlu0 %2374
        %2376 = vrot.lane.b32.xlu0 %v1892, 32
        %v2377 = vpop.permute.xlu0 %2376
        %2378 = vrot.lane.b32.xlu0 %v1897, 32
        %v2379 = vpop.permute.xlu0 %2378
        %2380 = vrot.lane.b32.xlu0 %v1902, 32
        %v2381 = vpop.permute.xlu0 %2380
        %2382 = vrot.lane.b32.xlu0 %v1907, 32
        %v2383 = vpop.permute.xlu0 %2382
        %2400 = vrot.lane.b32.xlu0 %v2290, 48
        %v2401 = vpop.permute.xlu0 %2400
        %2402 = vrot.lane.b32.xlu0 %v2295, 48
        %v2403 = vpop.permute.xlu0 %2402
        %2404 = vrot.lane.b32.xlu0 %v2300, 48
        %v2405 = vpop.permute.xlu0 %2404
        %2406 = vrot.lane.b32.xlu0 %v2305, 48
        %v2407 = vpop.permute.xlu0 %2406
        %2408 = vrot.lane.b32.xlu0 %v2310, 48
        %v2409 = vpop.permute.xlu0 %2408
        %2410 = vrot.lane.b32.xlu0 %v2315, 48
        %v2411 = vpop.permute.xlu0 %2410
        %2412 = vrot.lane.b32.xlu0 %v2320, 48
        %v2413 = vpop.permute.xlu0 %2412
        %2414 = vrot.lane.b32.xlu0 %v2325, 48
        %v2415 = vpop.permute.xlu0 %2414
        %v2424 = vsel %vm703, %v1028, %v2337
        %v2425 = vsel %vm703, %v1033, %v2339
        %v2426 = vsel %vm703, %v1038, %v2341
        %v2427 = vsel %vm703, %v1043, %v2343
        %v2428 = vsel %vm703, %v1048, %v2345
        %v2429 = vsel %vm703, %v1053, %v2347
        %v2430 = vsel %vm703, %v1058, %v2349
        %v2431 = vsel %vm703, %v1063, %v2351
        %vm2432 = vcmask 261120
        %v2433 = vsel %vm2432, %v2424, %v2369
        %v2434 = vsel %vm2432, %v2425, %v2371
        %v2435 = vsel %vm2432, %v2426, %v2373
        %v2436 = vsel %vm2432, %v2427, %v2375
        %v2437 = vsel %vm2432, %v2428, %v2377
        %v2438 = vsel %vm2432, %v2429, %v2379
        %v2439 = vsel %vm2432, %v2430, %v2381
        %v2440 = vsel %vm2432, %v2431, %v2383
        %vm2441 = vcmask 392192
        %v2442 = vsel %vm2441, %v2433, %v2401
        %v2443 = vsel %vm2441, %v2434, %v2403
        %v2444 = vsel %vm2441, %v2435, %v2405
        %v2445 = vsel %vm2441, %v2436, %v2407
        %v2446 = vsel %vm2441, %v2437, %v2409
        %v2447 = vsel %vm2441, %v2438, %v2411
        %v2448 = vsel %vm2441, %v2439, %v2413
        %v2449 = vsel %vm2441, %v2440, %v2415
        %v2450 = vpack.c.bf16 %v2443, %v2442
        %v2451 = vpack.c.bf16 %v2445, %v2444
        %v2452 = vpack.c.bf16 %v2447, %v2446
        %v2453 = vpack.c.bf16 %v2449, %v2448
        %v2455 = vlaneseq
        %v2456 = vshrl.u32 %v2455, 7
        %v2457 = vsub.s32 0, %v2456
        %v2458 = vrot.slane %v535, %v2457
        %v2468 = vunpack.c.l.b16 %v527
        %v2469 = vunpack.c.l.b16 %v528
        %v2470 = vunpack.c.l.b16 %v529
        %v2471 = vunpack.c.l.b16 %v530
        %v2472 = vunpack.c.l.b16 %v531
        %v2473 = vunpack.c.l.b16 %v532
        %v2474 = vunpack.c.l.b16 %v533
        %v2475 = vunpack.c.l.b16 %v534
        %v2476 = vpack.c.b16 %v2469, %v2468
        %v2477 = vpack.c.b16 %v2471, %v2470
        %v2478 = vpack.c.b16 %v2473, %v2472
        %v2479 = vpack.c.b16 %v2475, %v2474
        %v2485 = vsel %vm593, %v2450, 0
        %v2488 = vsel %vm593, %v2451, 0
        %v2491 = vsel %vm593, %v2452, 0
        %v2494 = vsel %vm593, %v2453, 0
        %2496 = vmatprep.subr.bf16.mxu0 0
        %2497 = vmatpush1.bf16.msra.mxu0 0
        %2498 = vmatprep.subr.bf16.mxu0 0
        %2499 = vmatpush1.bf16.msra.mxu0 0
        %2500 = vmatprep.subr.bf16.mxu0 0
        %2501 = vmatpush1.bf16.msra.mxu0 0
        %2502 = vmatprep.subr.bf16.mxu0 0
        %2503 = vmatpush1.bf16.msra.mxu0 0
        %2504 = vmatprep.subr.bf16.mxu0 0
        %2505 = vmatpush1.bf16.msra.mxu0 %v2479
        %2506 = vmatprep.subr.bf16.mxu0 0
        %2507 = vmatpush1.bf16.msra.mxu0 %v2478
        %2508 = vmatprep.subr.bf16.mxu0 0
        %2509 = vmatpush1.bf16.msra.mxu0 %v2477
        %2510 = vmatprep.subr.bf16.mxu0 0
        %2511 = vmatpush1.bf16.msra.mxu0 %v2476
        %2512 = vmatprep.subr.bf16.mxu0 0
        %2513 = vmatpush2.bf16.msra.mxu0 0
        %2514 = vmatprep.subr.bf16.mxu0 0
        %2515 = vmatpush2.bf16.msra.mxu0 0
        %2516 = vmatprep.subr.bf16.mxu0 0
        %2517 = vmatpush2.bf16.msra.mxu0 0
        %2518 = vmatprep.subr.bf16.mxu0 0
        %2519 = vmatpush2.bf16.msra.mxu0 0
        %2520 = vmatprep.subr.bf16.mxu0 0
        %2521 = vmatpush2.bf16.msra.mxu0 0
        %2522 = vmatprep.subr.bf16.mxu0 0
        %2523 = vmatpush2.bf16.msra.mxu0 0
        %2524 = vmatprep.subr.bf16.mxu0 0
        %2525 = vmatpush2.bf16.msra.mxu0 0
        %2526 = vmatprep.subr.bf16.mxu0 0
        %2527 = vmatpush2.bf16.msra.mxu0 0
        %2528 = vmatprep.mubr.bf16.mxu0 0
        %2529 = vmatmul.mubr.bf16.gmra.mxu0 %v2485
        %v2530 = vpop.f32.mrf.mxu0
        %v2531 = vadd.f32 %v2458, %v2530
        %v2532 = vpop.f32.mrf.mxu0
        %v2533 = vpop.f32.mrf.mxu0
        %v2534 = vadd.f32 %v2458, %v2533
        %v2535 = vpop.f32.mrf.mxu0
        %2536 = vmatprep.mubr.bf16.mxu0 0
        %2537 = vmatmul.mubr.bf16.gmra.mxu0 %v2488
        %v2538 = vpop.f32.mrf.mxu0
        %v2539 = vadd.f32 %v2458, %v2538
        %v2540 = vpop.f32.mrf.mxu0
        %v2541 = vpop.f32.mrf.mxu0
        %v2542 = vadd.f32 %v2458, %v2541
        %v2543 = vpop.f32.mrf.mxu0
        %2544 = vmatprep.mubr.bf16.mxu0 0
        %2545 = vmatmul.mubr.bf16.gmra.mxu0 %v2491
        %v2546 = vpop.f32.mrf.mxu0
        %v2547 = vadd.f32 %v2458, %v2546
        %v2548 = vpop.f32.mrf.mxu0
        %v2549 = vpop.f32.mrf.mxu0
        %v2550 = vadd.f32 %v2458, %v2549
        %v2551 = vpop.f32.mrf.mxu0
        %2552 = vmatprep.mubr.bf16.mxu0 0
        %2553 = vmatmul.mubr.bf16.gmra.mxu0 %v2494
        %v2554 = vpop.f32.mrf.mxu0
        %v2555 = vadd.f32 %v2458, %v2554
        %v2556 = vpop.f32.mrf.mxu0
        %v2557 = vpop.f32.mrf.mxu0
        %v2558 = vadd.f32 %v2458, %v2557
        %v2559 = vpop.f32.mrf.mxu0
        %2560 = vdwg.mxu0
        %v2561 = vadd.f32 %v510, %v2531
        %v2562 = vadd.f32 %v511, %v2534
        %v2563 = vadd.f32 %v512, %v2539
        %v2564 = vadd.f32 %v513, %v2542
        %v2565 = vadd.f32 %v514, %v2547
        %v2566 = vadd.f32 %v515, %v2550
        %v2567 = vadd.f32 %v516, %v2555
        %v2568 = vadd.f32 %v517, %v2558
        %v2569 = vsel %vm593, %v2561, 0.0
        %2570 = vadd.xlane.f32.xlu0 %v2569
        %v2571 = vpop.xlane.xlu0 %2570
        %v2572 = vsel %vm593, %v2562, 0.0
        %2573 = vadd.xlane.f32.xlu0 %v2572
        %v2574 = vpop.xlane.xlu0 %2573
        %v2575 = vsel %vm593, %v2563, 0.0
        %2576 = vadd.xlane.f32.xlu0 %v2575
        %v2577 = vpop.xlane.xlu0 %2576
        %v2578 = vsel %vm593, %v2564, 0.0
        %2579 = vadd.xlane.f32.xlu0 %v2578
        %v2580 = vpop.xlane.xlu0 %2579
        %v2581 = vsel %vm593, %v2565, 0.0
        %2582 = vadd.xlane.f32.xlu0 %v2581
        %v2583 = vpop.xlane.xlu0 %2582
        %v2584 = vsel %vm593, %v2566, 0.0
        %2585 = vadd.xlane.f32.xlu0 %v2584
        %v2586 = vpop.xlane.xlu0 %2585
        %v2587 = vsel %vm593, %v2567, 0.0
        %2588 = vadd.xlane.f32.xlu0 %v2587
        %v2589 = vpop.xlane.xlu0 %2588
        %v2590 = vsel %vm593, %v2568, 0.0
        %2591 = vadd.xlane.f32.xlu0 %v2590
        %v2592 = vpop.xlane.xlu0 %2591
        %v2593 = vrcp.pop 64.0
        %v2594 = vmul.f32 %v2571, %v2593
        %v2595 = vmul.f32 %v2574, %v2593
        %v2596 = vmul.f32 %v2577, %v2593
        %v2597 = vmul.f32 %v2580, %v2593
        %v2598 = vmul.f32 %v2583, %v2593
        %v2599 = vmul.f32 %v2586, %v2593
        %v2600 = vmul.f32 %v2589, %v2593
        %v2601 = vmul.f32 %v2592, %v2593
        %v2602 = vsub.f32 %v2561, %v2594
        %v2603 = vsub.f32 %v2562, %v2595
        %v2604 = vsub.f32 %v2563, %v2596
        %v2605 = vsub.f32 %v2564, %v2597
        %v2606 = vsub.f32 %v2565, %v2598
        %v2607 = vsub.f32 %v2566, %v2599
        %v2608 = vsub.f32 %v2567, %v2600
        %v2609 = vsub.f32 %v2568, %v2601
        %v2610 = vmul.f32 %v2602, %v2602
        %v2611 = vmul.f32 %v2603, %v2603
        %v2612 = vmul.f32 %v2604, %v2604
        %v2613 = vmul.f32 %v2605, %v2605
        %v2614 = vmul.f32 %v2606, %v2606
        %v2615 = vmul.f32 %v2607, %v2607
        %v2616 = vmul.f32 %v2608, %v2608
        %v2617 = vmul.f32 %v2609, %v2609
        %v2618 = vsel %vm593, %v2610, 0.0
        %2619 = vadd.xlane.f32.xlu0 %v2618
        %v2620 = vpop.xlane.xlu0 %2619
        %v2621 = vsel %vm593, %v2611, 0.0
        %2622 = vadd.xlane.f32.xlu0 %v2621
        %v2623 = vpop.xlane.xlu0 %2622
        %v2624 = vsel %vm593, %v2612, 0.0
        %2625 = vadd.xlane.f32.xlu0 %v2624
        %v2626 = vpop.xlane.xlu0 %2625
        %v2627 = vsel %vm593, %v2613, 0.0
        %2628 = vadd.xlane.f32.xlu0 %v2627
        %v2629 = vpop.xlane.xlu0 %2628
        %v2630 = vsel %vm593, %v2614, 0.0
        %2631 = vadd.xlane.f32.xlu0 %v2630
        %v2632 = vpop.xlane.xlu0 %2631
        %v2633 = vsel %vm593, %v2615, 0.0
        %2634 = vadd.xlane.f32.xlu0 %v2633
        %v2635 = vpop.xlane.xlu0 %2634
        %v2636 = vsel %vm593, %v2616, 0.0
        %2637 = vadd.xlane.f32.xlu0 %v2636
        %v2638 = vpop.xlane.xlu0 %2637
        %v2639 = vsel %vm593, %v2617, 0.0
        %2640 = vadd.xlane.f32.xlu0 %v2639
        %v2641 = vpop.xlane.xlu0 %2640
        %v2642 = vmul.f32 %v2620, %v2593
        %v2643 = vmul.f32 %v2623, %v2593
        %v2644 = vmul.f32 %v2626, %v2593
        %v2645 = vmul.f32 %v2629, %v2593
        %v2646 = vmul.f32 %v2632, %v2593
        %v2647 = vmul.f32 %v2635, %v2593
        %v2648 = vmul.f32 %v2638, %v2593
        %v2649 = vmul.f32 %v2641, %v2593
        %v2650 = vadd.f32 %v2642, 1e-05
        %v2651 = vadd.f32 %v2643, 1e-05
        %v2652 = vadd.f32 %v2644, 1e-05
        %v2653 = vadd.f32 %v2645, 1e-05
        %v2654 = vadd.f32 %v2646, 1e-05
        %v2655 = vadd.f32 %v2647, 1e-05
        %v2656 = vadd.f32 %v2648, 1e-05
        %v2657 = vadd.f32 %v2649, 1e-05
        %v2658 = vrsqrt.pop %v2650
        %v2659 = vrsqrt.pop %v2651
        %v2660 = vrsqrt.pop %v2652
        %v2661 = vrsqrt.pop %v2653
        %v2662 = vrsqrt.pop %v2654
        %v2663 = vrsqrt.pop %v2655
        %v2664 = vrsqrt.pop %v2656
        %v2665 = vrsqrt.pop %v2657
        %v2666 = vmul.f32 %v2602, %v2658
        %v2667 = vmul.f32 %v2603, %v2659
        %v2668 = vmul.f32 %v2604, %v2660
        %v2669 = vmul.f32 %v2605, %v2661
        %v2670 = vmul.f32 %v2606, %v2662
        %v2671 = vmul.f32 %v2607, %v2663
        %v2672 = vmul.f32 %v2608, %v2664
        %v2673 = vmul.f32 %v2609, %v2665
        %v2675 = vlaneseq
        %v2676 = vshrl.u32 %v2675, 7
        %v2677 = vsub.s32 0, %v2676
        %v2678 = vrot.slane %v536, %v2677
        %v2680 = vmul.f32 %v2666, %v2678
        %v2681 = vmul.f32 %v2667, %v2678
        %v2682 = vmul.f32 %v2668, %v2678
        %v2683 = vmul.f32 %v2669, %v2678
        %v2684 = vmul.f32 %v2670, %v2678
        %v2685 = vmul.f32 %v2671, %v2678
        %v2686 = vmul.f32 %v2672, %v2678
        %v2687 = vmul.f32 %v2673, %v2678
        %v2689 = vlaneseq
        %v2690 = vshrl.u32 %v2689, 7
        %v2691 = vsub.s32 0, %v2690
        %v2692 = vrot.slane %v537, %v2691
        %v2694 = vadd.f32 %v2680, %v2692
        %v2695 = vadd.f32 %v2681, %v2692
        %v2696 = vadd.f32 %v2682, %v2692
        %v2697 = vadd.f32 %v2683, %v2692
        %v2698 = vadd.f32 %v2684, %v2692
        %v2699 = vadd.f32 %v2685, %v2692
        %v2700 = vadd.f32 %v2686, %v2692
        %v2701 = vadd.f32 %v2687, %v2692
        %2702 = vst.msk [vmem:[%s367] sm:$0xff] %vm593, %v2694
        %2703 = vst.msk [vmem:[%s367 + $0x8] sm:$0xff] %vm593, %v2695
        %2704 = vst.msk [vmem:[%s367 + $0x10] sm:$0xff] %vm593, %v2696
        %2705 = vst.msk [vmem:[%s367 + $0x18] sm:$0xff] %vm593, %v2697
        %2706 = vst.msk [vmem:[%s367 + $0x20] sm:$0xff] %vm593, %v2698
        %2707 = vst.msk [vmem:[%s367 + $0x28] sm:$0xff] %vm593, %v2699
        %2708 = vst.msk [vmem:[%s367 + $0x30] sm:$0xff] %vm593, %v2700
        %2709 = vst.msk [vmem:[%s367 + $0x38] sm:$0xff] %vm593, %v2701
        %s2710 = sand.u32 %s248, 1
        %s2711 = scalar_lea.sflag [#allocation4], %s2710
        %s2712 = sand.u32 %s248, 1
        %s2713 = smul.addr %s2712, 64
        %s2714 = scalar_lea.vmem [#allocation5], %s2713
        // Predicated region
        $region65: #{tpu_custom_call.1} parent=59 // pred_check
          %p2715 = pneg %p258
        $region66: #{tpu_custom_call.1} parent=59 // pred_check_branch
          %2717 = sbr.rel (%p2715) target = $region68
        $region67: #{tpu_custom_call.1} parent=59 // pred_region
          %s2719 = ssub.s32 1024, 1024
          %2720 = vsyncadd %s2711, %s2719
          %s2721 = smul.addr %s25, 8
          %s2722 = smul.addr %s2721, 128
          %s2723 = scalar_lea.hbm %s10, %s2722
          %s2724 = sshll.u32 %s2714, 4
          %s2725 = int_to_ptr.vmem [resolvable:$true] %s2724
          %2730 = dma.vmem_to_hbm [thread:$0]  %s2725, 1024, %s2723, %s2711, 128, 128, 8
        $region68: #{tpu_custom_call.1} parent=59 // pred_fallthru
          _
      $region60: #{tpu_custom_call.1} parent=5 // pred_fallthru
        _
      %p2731 = scmp.le.s32.totalorder 2, %s20
      // Predicated region
      $region69: #{tpu_custom_call.1} parent=5 // pred_check
        %p2732 = pneg %p2731
      $region70: #{tpu_custom_call.1} parent=5 // pred_check_branch
        %2734 = sbr.rel (%p2732) target = $region72
      $region71: #{tpu_custom_call.1} parent=5 // pred_region
        %s2735 = ssub.s32 %s20, 2
        // Predicated region
        $region73: #{tpu_custom_call.1} parent=71 // pred_check
          %p2736 = pneg %p264
        $region74: #{tpu_custom_call.1} parent=71 // pred_check_branch
          %2738 = sbr.rel (%p2736) target = $region76
        $region75: #{tpu_custom_call.1} parent=71 // pred_region
          %s2739 = sand.u32 %s249, 1
          %s2740 = scalar_lea.sflag [#allocation4], %s2739
          %s2741 = sand.u32 %s249, 1
          %s2742 = smul.addr %s2741, 64
          %s2743 = scalar_lea.vmem [#allocation5], %s2742
          %2744 = dma.done %s2740, 1024
        $region76: #{tpu_custom_call.1} parent=71 // pred_fallthru
          _
      $region72: #{tpu_custom_call.1} parent=5 // pred_fallthru
        _
    $region6: #{tpu_custom_call.1} parent=1 // loop_footer
      %s24 = sadd.s32 1, %s20
    $region7: #{tpu_custom_call.1} parent=1 // loop_footer_branch
      %19 = sbr.rel target = $region3
    $region8: #{tpu_custom_call.1} parent=1 // loop_exit
      _
    %2745 = vsyncpa [#allocation3], 1
    %s2746 = scalar_lea.sflag [#allocation3], 1
    %2747 = vsyncpa %s2746, 1
    %2748 = vsyncpa [#allocation4], 1
    %s2749 = scalar_lea.sflag [#allocation4], 1
    %2750 = vsyncpa %s2749, 1

</llo_original>
